<compile_context>
chip_gen: v6e
topology: v6e:2x2x1
jax: 0.10.0
libtpu: 0.0.40
codegen_flags: <defaults>
</compile_context>

<pallas_src>
import jax
import jax.numpy as jnp
from jax.experimental import pallas as pl
from jax.experimental.pallas import tpu as pltpu


# ---------------------------------------------------------------------------
# Fused C2f kernel (built per static config via closure)
# ---------------------------------------------------------------------------

def _silu_f32(y):
    # silu(y) = y * sigmoid(y); sigmoid(y) = 0.5 * tanh(0.5 * y) + 0.5
    # -> single EUP transcendental per element, kept in f32 (v5e-friendly).
    return y * (0.5 * jnp.tanh(0.5 * y) + 0.5)


def _make_c2f_kernel(*, n, c, H, W, shortcut):
    M = H * W

    def shift_lanes(x, s):
        # y[:, m] = x[:, m + s] if 0 <= m + s < M else 0     (s: static Python int)
        rows = x.shape[0]
        if s == 0:
            return x
        if s > 0:
            z = jnp.zeros((rows, s), x.dtype)
            return jnp.concatenate([x[:, s:], z], axis=1)
        z = jnp.zeros((rows, -s), x.dtype)
        return jnp.concatenate([z, x[:, : M + s]], axis=1)

    def conv3x3_bn_silu(x_f32, w9_ref, b_ref, mask_l, mask_r):
        # x_f32: (cin, M) f32; w9_ref: (9, cout, cin) bf16 (BN scale folded in);
        # b_ref: (cout, 1) f32.  "same" 3x3 conv = 9 shifted matmuls, f32 acc.
        acc = None
        for di in range(3):
            for dj in range(3):
                s = (di - 1) * W + (dj - 1)
                xs = shift_lanes(x_f32, s).astype(jnp.bfloat16)
                contrib = jnp.dot(w9_ref[di * 3 + dj], xs,
                                  preferred_element_type=jnp.float32)
                if dj == 0:          # reads column w-1 -> invalid at output w == 0
                    contrib = contrib * mask_l
                elif dj == 2:        # reads column w+1 -> invalid at output w == W-1
                    contrib = contrib * mask_r
                acc = contrib if acc is None else acc + contrib
        return _silu_f32(acc + b_ref[...])

    def kernel(*refs):
        x_ref, ml_ref, mr_ref, wcv1_ref, bcv1_ref = refs[:5]
        m_refs = refs[5:5 + 4 * n]
        wcv2_ref = refs[5 + 4 * n]
        bcv2_ref = refs[6 + 4 * n]
        o_ref = refs[7 + 4 * n]

        mask_l = ml_ref[...]                     # (1, M) f32
        mask_r = mr_ref[...]                     # (1, M) f32

        # cv1: 1x1 conv -> folded BN -> SiLU
        x_bf = x_ref[...].astype(jnp.bfloat16)   # (c1, M)
        y0 = jnp.dot(wcv1_ref[...], x_bf, preferred_element_type=jnp.float32)
        y0 = _silu_f32(y0 + bcv1_ref[...])       # (2c, M) f32

        ys = [y0[:c, :], y0[c:, :]]              # chunk(2, dim=channels)
        for i in range(n):
            inp = ys[-1]
            w1, b1, w2, b2 = m_refs[4 * i: 4 * i + 4]
            h1 = conv3x3_bn_silu(inp, w1, b1, mask_l, mask_r)
            h2 = conv3x3_bn_silu(h1, w2, b2, mask_l, mask_r)
            if shortcut:
                h2 = h2 + inp
            ys.append(h2)

        # cv2 over the channel concat, done as a sum of per-chunk matmuls
        # (weight repacked to (2+n, c2, c)) -> no concatenated tensor anywhere.
        acc = None
        for j, yj in enumerate(ys):
            contrib = jnp.dot(wcv2_ref[j], yj.astype(jnp.bfloat16),
                              preferred_element_type=jnp.float32)
            acc = contrib if acc is None else acc + contrib
        o_ref[...] = _silu_f32(acc + bcv2_ref[...]).astype(o_ref.dtype)

    return kernel


# ---------------------------------------------------------------------------
# Wrapper: BN folding, weight repacking, pallas_call
# ---------------------------------------------------------------------------

def _fold_conv_bn(p, eps=1e-5):
    scale = p["gamma"] / jnp.sqrt(p["var"] + eps)           # (cout,)
    bias = p["beta"] - p["mean"] * scale                     # (cout,)
    w_folded = p["w"] * scale[:, None, None, None]           # scale folded into weight
    return w_folded, bias.reshape(-1, 1).astype(jnp.float32)


def c2f_forward(x, params, shortcut=False):
    """C2f forward pass (inference-mode BN). NCHW float32 in / out."""
    b, c1, hh, ww = x.shape
    mm = hh * ww
    c = params["c"]
    n = params["n"]
    c2 = params["cv2"]["w"].shape[0]

    # --- fold BN + repack weights (tiny, wrapper-side) ---
    wcv1_f, bcv1 = _fold_conv_bn(params["cv1"])
    wcv1 = wcv1_f[:, :, 0, 0].astype(jnp.bfloat16)                       # (2c, c1)

    m_args = []
    for i in range(n):
        for which in ("cv1", "cv2"):
            wf, bf = _fold_conv_bn(params["m"][i][which])
            # (cout, cin, 3, 3) -> (9, cout, cin), tap index k = di*3 + dj
            w9 = jnp.transpose(wf, (2, 3, 0, 1)).reshape(9, wf.shape[0], wf.shape[1])
            m_args += [w9.astype(jnp.bfloat16), bf]

    wcv2_f, bcv2 = _fold_conv_bn(params["cv2"])
    wcv2_2d = wcv2_f[:, :, 0, 0]                                         # (c2, (2+n)c)
    wcv2 = jnp.transpose(wcv2_2d.reshape(c2, 2 + n, c), (1, 0, 2)).astype(jnp.bfloat16)

    # Column-validity masks for the in-kernel 3x3 shifts (depend only on H, W).
    col = jnp.arange(mm, dtype=jnp.int32) % ww
    mask_l = (col != 0).astype(jnp.float32).reshape(1, mm)
    mask_r = (col != ww - 1).astype(jnp.float32).reshape(1, mm)

    x3 = x.reshape(b, c1, mm).astype(jnp.float32)

    kernel = _make_c2f_kernel(n=n, c=c, H=hh, W=ww, shortcut=shortcut)

    const2 = lambda bi: (0, 0)
    const3 = lambda bi: (0, 0, 0)

    in_specs = [
        pl.BlockSpec((None, c1, mm), lambda bi: (bi, 0, 0)),   # x        (per-batch)
        pl.BlockSpec((1, mm), const2),                          # mask_l   (resident)
        pl.BlockSpec((1, mm), const2),                          # mask_r
        pl.BlockSpec((2 * c, c1), const2),                      # w_cv1
        pl.BlockSpec((2 * c, 1), const2),                       # b_cv1
    ]
    args = [x3, mask_l, mask_r, wcv1, bcv1]
    for _ in range(n):
        in_specs += [
            pl.BlockSpec((9, c, c), const3), pl.BlockSpec((c, 1), const2),   # m.cv1
            pl.BlockSpec((9, c, c), const3), pl.BlockSpec((c, 1), const2),   # m.cv2
        ]
    args += m_args
    in_specs += [pl.BlockSpec((2 + n, c2, c), const3), pl.BlockSpec((c2, 1), const2)]
    args += [wcv2, bcv2]

    out_spec = pl.BlockSpec((None, c2, mm), lambda bi: (bi, 0, 0))

    flops = (2 * b * mm * c1 * 2 * c
             + n * 2 * (2 * b * mm * 9 * c * c)
             + 2 * b * mm * (2 + n) * c * c2)
    transc = b * mm * (2 * c + 2 * n * c + c2)
    bytes_acc = (4 * b * c1 * mm + 4 * b * c2 * mm + 2 * 4 * mm
                 + 2 * (2 * c * c1 + n * 2 * 9 * c * c + (2 + n) * c * c2)
                 + 4 * (2 * c + 2 * n * c + c2))

    out = pl.pallas_call(
        kernel,
        out_shape=jax.ShapeDtypeStruct((b, c2, mm), jnp.float32),
        grid_spec=pltpu.PrefetchScalarGridSpec(
            num_scalar_prefetch=0,
            grid=(b,),                       # B=2 -> >=2 parallel steps (v7x dual TC)
            in_specs=in_specs,
            out_specs=out_spec,
        ),
        compiler_params=pltpu.CompilerParams(
            dimension_semantics=("parallel",),
            vmem_limit_bytes=32 * 1024 * 1024,   # working set << limit on all gens
        ),
        cost_estimate=pl.CostEstimate(flops=flops, transcendentals=transc,
                                      bytes_accessed=bytes_acc),
    )(*args)

    return out.reshape(b, c2, hh, ww)


# ---------------------------------------------------------------------------
# Parameter construction + pure-JAX reference (spec check)
# ---------------------------------------------------------------------------

def _make_conv_params(key, c_out, c_in, ksize):
    kw, kg, kb, km, kv = jax.random.split(key, 5)
    fan_in = float(c_in * ksize * ksize)
    return {
        "w": jax.random.normal(kw, (c_out, c_in, ksize, ksize), jnp.float32)
        / jnp.sqrt(fan_in),
        "gamma": jax.random.uniform(kg, (c_out,), jnp.float32, 0.5, 1.5),
        "beta": jax.random.normal(kb, (c_out,), jnp.float32) * 0.1,
        "mean": jax.random.normal(km, (c_out,), jnp.float32) * 0.1,
        "var": jax.random.uniform(kv, (c_out,), jnp.float32, 0.5, 1.5),
    }


def make_c2f_params(key, c1, c2, n=1, e=0.5):
    c = int(c2 * e)
    keys = jax.random.split(key, 2 + 2 * n)
    return {
        "c": c,
        "n": n,
        "cv1": _make_conv_params(keys[0], 2 * c, c1, 1),
        "cv2": _make_conv_params(keys[1], c2, (2 + n) * c, 1),
        "m": [
            {
                "cv1": _make_conv_params(keys[2 + 2 * i], c, c, 3),
                "cv2": _make_conv_params(keys[3 + 2 * i], c, c, 3),
            }
            for i in range(n)
        ],
    }


def _conv_bn_silu_ref(x, p, eps=1e-5):
    pad = p["w"].shape[2] // 2
    out = jax.lax.conv_general_dilated(
        x, p["w"], window_strides=(1, 1),
        padding=[(pad, pad), (pad, pad)],
        dimension_numbers=("NCHW", "OIHW", "NCHW"),
        precision=jax.lax.Precision.HIGHEST,
    )
    g = p["gamma"].reshape(1, -1, 1, 1)
    bta = p["beta"].reshape(1, -1, 1, 1)
    mu = p["mean"].reshape(1, -1, 1, 1)
    var = p["var"].reshape(1, -1, 1, 1)
    out = (out - mu) / jnp.sqrt(var + eps) * g + bta
    return out * jax.nn.sigmoid(out)


def c2f_forward_reference(x, params, shortcut=False):
    c = params["c"]
    n = params["n"]
    y0 = _conv_bn_silu_ref(x, params["cv1"])
    ys = [y0[:, :c], y0[:, c:]]
    for i in range(n):
        inp = ys[-1]
        h1 = _conv_bn_silu_ref(inp, params["m"][i]["cv1"])
        h2 = _conv_bn_silu_ref(h1, params["m"][i]["cv2"])
        if shortcut:
            h2 = inp + h2
        ys.append(h2)
    return _conv_bn_silu_ref(jnp.concatenate(ys, axis=1), params["cv2"])


if __name__ == "__main__":
    key = jax.random.PRNGKey(0)
    kx, kp = jax.random.split(key)

    B, C1, C2, N, H, W = 2, 32, 32, 1, 16, 16
    SHORTCUT = True  # Bottleneck c1 == c2, so the residual path is exercised

    x = jax.random.normal(kx, (B, C1, H, W), dtype=jnp.float32)
    params = make_c2f_params(kp, C1, C2, n=N)

    out = jax.block_until_ready(c2f_forward(x, params, shortcut=SHORTCUT))
    ref = c2f_forward_reference(x, params, shortcut=SHORTCUT)

    assert out.shape == ref.shape and out.dtype == ref.dtype
    max_err = float(jnp.max(jnp.abs(out - ref)))
    # bf16 MXU operands (single pass, f32 accumulation) vs the f32-HIGHEST
    # reference: tolerance deliberately loosened; structural bugs would be O(1).
    assert jnp.allclose(out, ref, atol=3e-2, rtol=3e-2), f"mismatch vs reference: {max_err}"

    print("KERNEL_OK")
</pallas_src>

<mosaic_0001>
module attributes {stable_mosaic.version = 11 : i64} {
  func.func @kernel(%arg0: i32, %arg1: memref<1x32x256xf32, #tpu.memory_space<vmem>>, %arg2: memref<1x256xf32, #tpu.memory_space<vmem>>, %arg3: memref<1x256xf32, #tpu.memory_space<vmem>>, %arg4: memref<32x32xbf16, #tpu.memory_space<vmem>>, %arg5: memref<32x1xf32, #tpu.memory_space<vmem>>, %arg6: memref<9x16x16xbf16, #tpu.memory_space<vmem>>, %arg7: memref<16x1xf32, #tpu.memory_space<vmem>>, %arg8: memref<9x16x16xbf16, #tpu.memory_space<vmem>>, %arg9: memref<16x1xf32, #tpu.memory_space<vmem>>, %arg10: memref<3x32x16xbf16, #tpu.memory_space<vmem>>, %arg11: memref<32x1xf32, #tpu.memory_space<vmem>>, %arg12: memref<1x32x256xf32, #tpu.memory_space<vmem>>) attributes {dimension_semantics = [#tpu.dimension_semantics<parallel>], iteration_bounds = array<i64: 2>, scalar_prefetch = 0 : i64, scratch_operands = 0 : i64, tpu.core_type = #tpu.core_type<tc>, window_params = [{transform_indices = @transform_0, window_bounds = array<i64: 1, 32, 256>}, {pipeline_mode = #tpu.pipeline_mode<synchronous>, transform_indices = @transform_1, window_bounds = array<i64: 1, 256>}, {pipeline_mode = #tpu.pipeline_mode<synchronous>, transform_indices = @transform_2, window_bounds = array<i64: 1, 256>}, {pipeline_mode = #tpu.pipeline_mode<synchronous>, transform_indices = @transform_3, window_bounds = array<i64: 32, 32>}, {pipeline_mode = #tpu.pipeline_mode<synchronous>, transform_indices = @transform_4, window_bounds = array<i64: 32, 1>}, {pipeline_mode = #tpu.pipeline_mode<synchronous>, transform_indices = @transform_5, window_bounds = array<i64: 9, 16, 16>}, {pipeline_mode = #tpu.pipeline_mode<synchronous>, transform_indices = @transform_6, window_bounds = array<i64: 16, 1>}, {pipeline_mode = #tpu.pipeline_mode<synchronous>, transform_indices = @transform_7, window_bounds = array<i64: 9, 16, 16>}, {pipeline_mode = #tpu.pipeline_mode<synchronous>, transform_indices = @transform_8, window_bounds = array<i64: 16, 1>}, {pipeline_mode = #tpu.pipeline_mode<synchronous>, transform_indices = @transform_9, window_bounds = array<i64: 3, 32, 16>}, {pipeline_mode = #tpu.pipeline_mode<synchronous>, transform_indices = @transform_10, window_bounds = array<i64: 32, 1>}, {transform_indices = @transform_11, window_bounds = array<i64: 1, 32, 256>}]} {
    %c0 = arith.constant 0 : index
    %c0_0 = arith.constant 0 : index
    %0 = vector.load %arg2[%c0, %c0_0] : memref<1x256xf32, #tpu.memory_space<vmem>>, vector<1x256xf32>
    %c0_1 = arith.constant 0 : index
    %c0_2 = arith.constant 0 : index
    %1 = vector.load %arg3[%c0_1, %c0_2] : memref<1x256xf32, #tpu.memory_space<vmem>>, vector<1x256xf32>
    %c0_3 = arith.constant 0 : index
    %c0_4 = arith.constant 0 : index
    %c0_5 = arith.constant 0 : index
    %2 = vector.load %arg1[%c0_3, %c0_4, %c0_5] : memref<1x32x256xf32, #tpu.memory_space<vmem>>, vector<1x32x256xf32>
    %3 = vector.shape_cast %2 : vector<1x32x256xf32> to vector<32x256xf32>
    %4 = arith.truncf %3 : vector<32x256xf32> to vector<32x256xbf16>
    %c0_6 = arith.constant 0 : index
    %c0_7 = arith.constant 0 : index
    %5 = vector.load %arg4[%c0_6, %c0_7] : memref<32x32xbf16, #tpu.memory_space<vmem>>, vector<32x32xbf16>
    %cst = arith.constant dense<0.000000e+00> : vector<32x256xf32>
    %6 = tpu.matmul %5, %4, %cst {dimension_numbers = #tpu.dot_dimension_numbers<[1], [0], [0], [1], [0, 0, 1, 1], [], []>} : vector<32x32xbf16>, vector<32x256xbf16>, vector<32x256xf32> -> vector<32x256xf32>
    %c0_8 = arith.constant 0 : index
    %c0_9 = arith.constant 0 : index
    %7 = vector.load %arg5[%c0_8, %c0_9] : memref<32x1xf32, #tpu.memory_space<vmem>>, vector<32x1xf32>
    %8 = vector.broadcast %7 : vector<32x1xf32> to vector<32x256xf32>
    %9 = arith.addf %6, %8 : vector<32x256xf32>
    %cst_10 = arith.constant 5.000000e-01 : f32
    %10 = vector.broadcast %cst_10 : f32 to vector<32x256xf32>
    %11 = arith.mulf %10, %9 : vector<32x256xf32>
    %12 = math.tanh %11 : vector<32x256xf32>
    %cst_11 = arith.constant 5.000000e-01 : f32
    %13 = vector.broadcast %cst_11 : f32 to vector<32x256xf32>
    %14 = arith.mulf %13, %12 : vector<32x256xf32>
    %cst_12 = arith.constant 5.000000e-01 : f32
    %15 = vector.broadcast %cst_12 : f32 to vector<32x256xf32>
    %16 = arith.addf %14, %15 : vector<32x256xf32>
    %17 = arith.mulf %9, %16 : vector<32x256xf32>
    %18 = vector.extract_strided_slice %17 {offsets = [0, 0], sizes = [16, 256], strides = [1, 1]} : vector<32x256xf32> to vector<16x256xf32>
    %19 = vector.extract_strided_slice %17 {offsets = [16, 0], sizes = [16, 256], strides = [1, 1]} : vector<32x256xf32> to vector<16x256xf32>
    %cst_13 = arith.constant 0.000000e+00 : f32
    %20 = vector.broadcast %cst_13 : f32 to vector<16x17xf32>
    %21 = vector.extract_strided_slice %19 {offsets = [0, 0], sizes = [16, 239], strides = [1, 1]} : vector<16x256xf32> to vector<16x239xf32>
    %22 = tpu.concatenate %20, %21 in 1 : vector<16x17xf32>, vector<16x239xf32> -> vector<16x256xf32>
    %23 = arith.truncf %22 : vector<16x256xf32> to vector<16x256xbf16>
    %c0_14 = arith.constant 0 : index
    %c0_15 = arith.constant 0 : index
    %c0_16 = arith.constant 0 : index
    %24 = vector.load %arg6[%c0_14, %c0_15, %c0_16] : memref<9x16x16xbf16, #tpu.memory_space<vmem>>, vector<1x16x16xbf16>
    %25 = vector.shape_cast %24 : vector<1x16x16xbf16> to vector<16x16xbf16>
    %cst_17 = arith.constant dense<0.000000e+00> : vector<16x256xf32>
    %26 = tpu.matmul %25, %23, %cst_17 {dimension_numbers = #tpu.dot_dimension_numbers<[1], [0], [0], [1], [0, 0, 1, 1], [], []>} : vector<16x16xbf16>, vector<16x256xbf16>, vector<16x256xf32> -> vector<16x256xf32>
    %27 = vector.broadcast %0 : vector<1x256xf32> to vector<16x256xf32>
    %28 = arith.mulf %26, %27 : vector<16x256xf32>
    %cst_18 = arith.constant 0.000000e+00 : f32
    %29 = vector.broadcast %cst_18 : f32 to vector<16x16xf32>
    %30 = vector.extract_strided_slice %19 {offsets = [0, 0], sizes = [16, 240], strides = [1, 1]} : vector<16x256xf32> to vector<16x240xf32>
    %31 = tpu.concatenate %29, %30 in 1 : vector<16x16xf32>, vector<16x240xf32> -> vector<16x256xf32>
    %32 = arith.truncf %31 : vector<16x256xf32> to vector<16x256xbf16>
    %c1 = arith.constant 1 : index
    %c0_19 = arith.constant 0 : index
    %c0_20 = arith.constant 0 : index
    %33 = vector.load %arg6[%c1, %c0_19, %c0_20] : memref<9x16x16xbf16, #tpu.memory_space<vmem>>, vector<1x16x16xbf16>
    %34 = vector.shape_cast %33 : vector<1x16x16xbf16> to vector<16x16xbf16>
    %cst_21 = arith.constant dense<0.000000e+00> : vector<16x256xf32>
    %35 = tpu.matmul %34, %32, %cst_21 {dimension_numbers = #tpu.dot_dimension_numbers<[1], [0], [0], [1], [0, 0, 1, 1], [], []>} : vector<16x16xbf16>, vector<16x256xbf16>, vector<16x256xf32> -> vector<16x256xf32>
    %36 = arith.addf %28, %35 : vector<16x256xf32>
    %cst_22 = arith.constant 0.000000e+00 : f32
    %37 = vector.broadcast %cst_22 : f32 to vector<16x15xf32>
    %38 = vector.extract_strided_slice %19 {offsets = [0, 0], sizes = [16, 241], strides = [1, 1]} : vector<16x256xf32> to vector<16x241xf32>
    %39 = tpu.concatenate %37, %38 in 1 : vector<16x15xf32>, vector<16x241xf32> -> vector<16x256xf32>
    %40 = arith.truncf %39 : vector<16x256xf32> to vector<16x256xbf16>
    %c2 = arith.constant 2 : index
    %c0_23 = arith.constant 0 : index
    %c0_24 = arith.constant 0 : index
    %41 = vector.load %arg6[%c2, %c0_23, %c0_24] : memref<9x16x16xbf16, #tpu.memory_space<vmem>>, vector<1x16x16xbf16>
    %42 = vector.shape_cast %41 : vector<1x16x16xbf16> to vector<16x16xbf16>
    %cst_25 = arith.constant dense<0.000000e+00> : vector<16x256xf32>
    %43 = tpu.matmul %42, %40, %cst_25 {dimension_numbers = #tpu.dot_dimension_numbers<[1], [0], [0], [1], [0, 0, 1, 1], [], []>} : vector<16x16xbf16>, vector<16x256xbf16>, vector<16x256xf32> -> vector<16x256xf32>
    %44 = vector.broadcast %1 : vector<1x256xf32> to vector<16x256xf32>
    %45 = arith.mulf %43, %44 : vector<16x256xf32>
    %46 = arith.addf %36, %45 : vector<16x256xf32>
    %cst_26 = arith.constant 0.000000e+00 : f32
    %47 = vector.broadcast %cst_26 : f32 to vector<16x1xf32>
    %48 = vector.extract_strided_slice %19 {offsets = [0, 0], sizes = [16, 255], strides = [1, 1]} : vector<16x256xf32> to vector<16x255xf32>
    %49 = tpu.concatenate %47, %48 in 1 : vector<16x1xf32>, vector<16x255xf32> -> vector<16x256xf32>
    %50 = arith.truncf %49 : vector<16x256xf32> to vector<16x256xbf16>
    %c3 = arith.constant 3 : index
    %c0_27 = arith.constant 0 : index
    %c0_28 = arith.constant 0 : index
    %51 = vector.load %arg6[%c3, %c0_27, %c0_28] : memref<9x16x16xbf16, #tpu.memory_space<vmem>>, vector<1x16x16xbf16>
    %52 = vector.shape_cast %51 : vector<1x16x16xbf16> to vector<16x16xbf16>
    %cst_29 = arith.constant dense<0.000000e+00> : vector<16x256xf32>
    %53 = tpu.matmul %52, %50, %cst_29 {dimension_numbers = #tpu.dot_dimension_numbers<[1], [0], [0], [1], [0, 0, 1, 1], [], []>} : vector<16x16xbf16>, vector<16x256xbf16>, vector<16x256xf32> -> vector<16x256xf32>
    %54 = vector.broadcast %0 : vector<1x256xf32> to vector<16x256xf32>
    %55 = arith.mulf %53, %54 : vector<16x256xf32>
    %56 = arith.addf %46, %55 : vector<16x256xf32>
    %57 = arith.truncf %19 : vector<16x256xf32> to vector<16x256xbf16>
    %c4 = arith.constant 4 : index
    %c0_30 = arith.constant 0 : index
    %c0_31 = arith.constant 0 : index
    %58 = vector.load %arg6[%c4, %c0_30, %c0_31] : memref<9x16x16xbf16, #tpu.memory_space<vmem>>, vector<1x16x16xbf16>
    %59 = vector.shape_cast %58 : vector<1x16x16xbf16> to vector<16x16xbf16>
    %cst_32 = arith.constant dense<0.000000e+00> : vector<16x256xf32>
    %60 = tpu.matmul %59, %57, %cst_32 {dimension_numbers = #tpu.dot_dimension_numbers<[1], [0], [0], [1], [0, 0, 1, 1], [], []>} : vector<16x16xbf16>, vector<16x256xbf16>, vector<16x256xf32> -> vector<16x256xf32>
    %61 = arith.addf %56, %60 : vector<16x256xf32>
    %cst_33 = arith.constant 0.000000e+00 : f32
    %62 = vector.broadcast %cst_33 : f32 to vector<16x1xf32>
    %63 = vector.extract_strided_slice %19 {offsets = [0, 1], sizes = [16, 255], strides = [1, 1]} : vector<16x256xf32> to vector<16x255xf32>
    %64 = tpu.concatenate %63, %62 in 1 : vector<16x255xf32>, vector<16x1xf32> -> vector<16x256xf32>
    %65 = arith.truncf %64 : vector<16x256xf32> to vector<16x256xbf16>
    %c5 = arith.constant 5 : index
    %c0_34 = arith.constant 0 : index
    %c0_35 = arith.constant 0 : index
    %66 = vector.load %arg6[%c5, %c0_34, %c0_35] : memref<9x16x16xbf16, #tpu.memory_space<vmem>>, vector<1x16x16xbf16>
    %67 = vector.shape_cast %66 : vector<1x16x16xbf16> to vector<16x16xbf16>
    %cst_36 = arith.constant dense<0.000000e+00> : vector<16x256xf32>
    %68 = tpu.matmul %67, %65, %cst_36 {dimension_numbers = #tpu.dot_dimension_numbers<[1], [0], [0], [1], [0, 0, 1, 1], [], []>} : vector<16x16xbf16>, vector<16x256xbf16>, vector<16x256xf32> -> vector<16x256xf32>
    %69 = vector.broadcast %1 : vector<1x256xf32> to vector<16x256xf32>
    %70 = arith.mulf %68, %69 : vector<16x256xf32>
    %71 = arith.addf %61, %70 : vector<16x256xf32>
    %cst_37 = arith.constant 0.000000e+00 : f32
    %72 = vector.broadcast %cst_37 : f32 to vector<16x15xf32>
    %73 = vector.extract_strided_slice %19 {offsets = [0, 15], sizes = [16, 241], strides = [1, 1]} : vector<16x256xf32> to vector<16x241xf32>
    %74 = tpu.concatenate %73, %72 in 1 : vector<16x241xf32>, vector<16x15xf32> -> vector<16x256xf32>
    %75 = arith.truncf %74 : vector<16x256xf32> to vector<16x256xbf16>
    %c6 = arith.constant 6 : index
    %c0_38 = arith.constant 0 : index
    %c0_39 = arith.constant 0 : index
    %76 = vector.load %arg6[%c6, %c0_38, %c0_39] : memref<9x16x16xbf16, #tpu.memory_space<vmem>>, vector<1x16x16xbf16>
    %77 = vector.shape_cast %76 : vector<1x16x16xbf16> to vector<16x16xbf16>
    %cst_40 = arith.constant dense<0.000000e+00> : vector<16x256xf32>
    %78 = tpu.matmul %77, %75, %cst_40 {dimension_numbers = #tpu.dot_dimension_numbers<[1], [0], [0], [1], [0, 0, 1, 1], [], []>} : vector<16x16xbf16>, vector<16x256xbf16>, vector<16x256xf32> -> vector<16x256xf32>
    %79 = vector.broadcast %0 : vector<1x256xf32> to vector<16x256xf32>
    %80 = arith.mulf %78, %79 : vector<16x256xf32>
    %81 = arith.addf %71, %80 : vector<16x256xf32>
    %cst_41 = arith.constant 0.000000e+00 : f32
    %82 = vector.broadcast %cst_41 : f32 to vector<16x16xf32>
    %83 = vector.extract_strided_slice %19 {offsets = [0, 16], sizes = [16, 240], strides = [1, 1]} : vector<16x256xf32> to vector<16x240xf32>
    %84 = tpu.concatenate %83, %82 in 1 : vector<16x240xf32>, vector<16x16xf32> -> vector<16x256xf32>
    %85 = arith.truncf %84 : vector<16x256xf32> to vector<16x256xbf16>
    %c7 = arith.constant 7 : index
    %c0_42 = arith.constant 0 : index
    %c0_43 = arith.constant 0 : index
    %86 = vector.load %arg6[%c7, %c0_42, %c0_43] : memref<9x16x16xbf16, #tpu.memory_space<vmem>>, vector<1x16x16xbf16>
    %87 = vector.shape_cast %86 : vector<1x16x16xbf16> to vector<16x16xbf16>
    %cst_44 = arith.constant dense<0.000000e+00> : vector<16x256xf32>
    %88 = tpu.matmul %87, %85, %cst_44 {dimension_numbers = #tpu.dot_dimension_numbers<[1], [0], [0], [1], [0, 0, 1, 1], [], []>} : vector<16x16xbf16>, vector<16x256xbf16>, vector<16x256xf32> -> vector<16x256xf32>
    %89 = arith.addf %81, %88 : vector<16x256xf32>
    %cst_45 = arith.constant 0.000000e+00 : f32
    %90 = vector.broadcast %cst_45 : f32 to vector<16x17xf32>
    %91 = vector.extract_strided_slice %19 {offsets = [0, 17], sizes = [16, 239], strides = [1, 1]} : vector<16x256xf32> to vector<16x239xf32>
    %92 = tpu.concatenate %91, %90 in 1 : vector<16x239xf32>, vector<16x17xf32> -> vector<16x256xf32>
    %93 = arith.truncf %92 : vector<16x256xf32> to vector<16x256xbf16>
    %c8 = arith.constant 8 : index
    %c0_46 = arith.constant 0 : index
    %c0_47 = arith.constant 0 : index
    %94 = vector.load %arg6[%c8, %c0_46, %c0_47] : memref<9x16x16xbf16, #tpu.memory_space<vmem>>, vector<1x16x16xbf16>
    %95 = vector.shape_cast %94 : vector<1x16x16xbf16> to vector<16x16xbf16>
    %cst_48 = arith.constant dense<0.000000e+00> : vector<16x256xf32>
    %96 = tpu.matmul %95, %93, %cst_48 {dimension_numbers = #tpu.dot_dimension_numbers<[1], [0], [0], [1], [0, 0, 1, 1], [], []>} : vector<16x16xbf16>, vector<16x256xbf16>, vector<16x256xf32> -> vector<16x256xf32>
    %97 = vector.broadcast %1 : vector<1x256xf32> to vector<16x256xf32>
    %98 = arith.mulf %96, %97 : vector<16x256xf32>
    %99 = arith.addf %89, %98 : vector<16x256xf32>
    %c0_49 = arith.constant 0 : index
    %c0_50 = arith.constant 0 : index
    %100 = vector.load %arg7[%c0_49, %c0_50] : memref<16x1xf32, #tpu.memory_space<vmem>>, vector<16x1xf32>
    %101 = vector.broadcast %100 : vector<16x1xf32> to vector<16x256xf32>
    %102 = arith.addf %99, %101 : vector<16x256xf32>
    %cst_51 = arith.constant 5.000000e-01 : f32
    %103 = vector.broadcast %cst_51 : f32 to vector<16x256xf32>
    %104 = arith.mulf %103, %102 : vector<16x256xf32>
    %105 = math.tanh %104 : vector<16x256xf32>
    %cst_52 = arith.constant 5.000000e-01 : f32
    %106 = vector.broadcast %cst_52 : f32 to vector<16x256xf32>
    %107 = arith.mulf %106, %105 : vector<16x256xf32>
    %cst_53 = arith.constant 5.000000e-01 : f32
    %108 = vector.broadcast %cst_53 : f32 to vector<16x256xf32>
    %109 = arith.addf %107, %108 : vector<16x256xf32>
    %110 = arith.mulf %102, %109 : vector<16x256xf32>
    %cst_54 = arith.constant 0.000000e+00 : f32
    %111 = vector.broadcast %cst_54 : f32 to vector<16x17xf32>
    %112 = vector.extract_strided_slice %110 {offsets = [0, 0], sizes = [16, 239], strides = [1, 1]} : vector<16x256xf32> to vector<16x239xf32>
    %113 = tpu.concatenate %111, %112 in 1 : vector<16x17xf32>, vector<16x239xf32> -> vector<16x256xf32>
    %114 = arith.truncf %113 : vector<16x256xf32> to vector<16x256xbf16>
    %c0_55 = arith.constant 0 : index
    %c0_56 = arith.constant 0 : index
    %c0_57 = arith.constant 0 : index
    %115 = vector.load %arg8[%c0_55, %c0_56, %c0_57] : memref<9x16x16xbf16, #tpu.memory_space<vmem>>, vector<1x16x16xbf16>
    %116 = vector.shape_cast %115 : vector<1x16x16xbf16> to vector<16x16xbf16>
    %cst_58 = arith.constant dense<0.000000e+00> : vector<16x256xf32>
    %117 = tpu.matmul %116, %114, %cst_58 {dimension_numbers = #tpu.dot_dimension_numbers<[1], [0], [0], [1], [0, 0, 1, 1], [], []>} : vector<16x16xbf16>, vector<16x256xbf16>, vector<16x256xf32> -> vector<16x256xf32>
    %118 = vector.broadcast %0 : vector<1x256xf32> to vector<16x256xf32>
    %119 = arith.mulf %117, %118 : vector<16x256xf32>
    %cst_59 = arith.constant 0.000000e+00 : f32
    %120 = vector.broadcast %cst_59 : f32 to vector<16x16xf32>
    %121 = vector.extract_strided_slice %110 {offsets = [0, 0], sizes = [16, 240], strides = [1, 1]} : vector<16x256xf32> to vector<16x240xf32>
    %122 = tpu.concatenate %120, %121 in 1 : vector<16x16xf32>, vector<16x240xf32> -> vector<16x256xf32>
    %123 = arith.truncf %122 : vector<16x256xf32> to vector<16x256xbf16>
    %c1_60 = arith.constant 1 : index
    %c0_61 = arith.constant 0 : index
    %c0_62 = arith.constant 0 : index
    %124 = vector.load %arg8[%c1_60, %c0_61, %c0_62] : memref<9x16x16xbf16, #tpu.memory_space<vmem>>, vector<1x16x16xbf16>
    %125 = vector.shape_cast %124 : vector<1x16x16xbf16> to vector<16x16xbf16>
    %cst_63 = arith.constant dense<0.000000e+00> : vector<16x256xf32>
    %126 = tpu.matmul %125, %123, %cst_63 {dimension_numbers = #tpu.dot_dimension_numbers<[1], [0], [0], [1], [0, 0, 1, 1], [], []>} : vector<16x16xbf16>, vector<16x256xbf16>, vector<16x256xf32> -> vector<16x256xf32>
    %127 = arith.addf %119, %126 : vector<16x256xf32>
    %cst_64 = arith.constant 0.000000e+00 : f32
    %128 = vector.broadcast %cst_64 : f32 to vector<16x15xf32>
    %129 = vector.extract_strided_slice %110 {offsets = [0, 0], sizes = [16, 241], strides = [1, 1]} : vector<16x256xf32> to vector<16x241xf32>
    %130 = tpu.concatenate %128, %129 in 1 : vector<16x15xf32>, vector<16x241xf32> -> vector<16x256xf32>
    %131 = arith.truncf %130 : vector<16x256xf32> to vector<16x256xbf16>
    %c2_65 = arith.constant 2 : index
    %c0_66 = arith.constant 0 : index
    %c0_67 = arith.constant 0 : index
    %132 = vector.load %arg8[%c2_65, %c0_66, %c0_67] : memref<9x16x16xbf16, #tpu.memory_space<vmem>>, vector<1x16x16xbf16>
    %133 = vector.shape_cast %132 : vector<1x16x16xbf16> to vector<16x16xbf16>
    %cst_68 = arith.constant dense<0.000000e+00> : vector<16x256xf32>
    %134 = tpu.matmul %133, %131, %cst_68 {dimension_numbers = #tpu.dot_dimension_numbers<[1], [0], [0], [1], [0, 0, 1, 1], [], []>} : vector<16x16xbf16>, vector<16x256xbf16>, vector<16x256xf32> -> vector<16x256xf32>
    %135 = vector.broadcast %1 : vector<1x256xf32> to vector<16x256xf32>
    %136 = arith.mulf %134, %135 : vector<16x256xf32>
    %137 = arith.addf %127, %136 : vector<16x256xf32>
    %cst_69 = arith.constant 0.000000e+00 : f32
    %138 = vector.broadcast %cst_69 : f32 to vector<16x1xf32>
    %139 = vector.extract_strided_slice %110 {offsets = [0, 0], sizes = [16, 255], strides = [1, 1]} : vector<16x256xf32> to vector<16x255xf32>
    %140 = tpu.concatenate %138, %139 in 1 : vector<16x1xf32>, vector<16x255xf32> -> vector<16x256xf32>
    %141 = arith.truncf %140 : vector<16x256xf32> to vector<16x256xbf16>
    %c3_70 = arith.constant 3 : index
    %c0_71 = arith.constant 0 : index
    %c0_72 = arith.constant 0 : index
    %142 = vector.load %arg8[%c3_70, %c0_71, %c0_72] : memref<9x16x16xbf16, #tpu.memory_space<vmem>>, vector<1x16x16xbf16>
    %143 = vector.shape_cast %142 : vector<1x16x16xbf16> to vector<16x16xbf16>
    %cst_73 = arith.constant dense<0.000000e+00> : vector<16x256xf32>
    %144 = tpu.matmul %143, %141, %cst_73 {dimension_numbers = #tpu.dot_dimension_numbers<[1], [0], [0], [1], [0, 0, 1, 1], [], []>} : vector<16x16xbf16>, vector<16x256xbf16>, vector<16x256xf32> -> vector<16x256xf32>
    %145 = vector.broadcast %0 : vector<1x256xf32> to vector<16x256xf32>
    %146 = arith.mulf %144, %145 : vector<16x256xf32>
    %147 = arith.addf %137, %146 : vector<16x256xf32>
    %148 = arith.truncf %110 : vector<16x256xf32> to vector<16x256xbf16>
    %c4_74 = arith.constant 4 : index
    %c0_75 = arith.constant 0 : index
    %c0_76 = arith.constant 0 : index
    %149 = vector.load %arg8[%c4_74, %c0_75, %c0_76] : memref<9x16x16xbf16, #tpu.memory_space<vmem>>, vector<1x16x16xbf16>
    %150 = vector.shape_cast %149 : vector<1x16x16xbf16> to vector<16x16xbf16>
    %cst_77 = arith.constant dense<0.000000e+00> : vector<16x256xf32>
    %151 = tpu.matmul %150, %148, %cst_77 {dimension_numbers = #tpu.dot_dimension_numbers<[1], [0], [0], [1], [0, 0, 1, 1], [], []>} : vector<16x16xbf16>, vector<16x256xbf16>, vector<16x256xf32> -> vector<16x256xf32>
    %152 = arith.addf %147, %151 : vector<16x256xf32>
    %cst_78 = arith.constant 0.000000e+00 : f32
    %153 = vector.broadcast %cst_78 : f32 to vector<16x1xf32>
    %154 = vector.extract_strided_slice %110 {offsets = [0, 1], sizes = [16, 255], strides = [1, 1]} : vector<16x256xf32> to vector<16x255xf32>
    %155 = tpu.concatenate %154, %153 in 1 : vector<16x255xf32>, vector<16x1xf32> -> vector<16x256xf32>
    %156 = arith.truncf %155 : vector<16x256xf32> to vector<16x256xbf16>
    %c5_79 = arith.constant 5 : index
    %c0_80 = arith.constant 0 : index
    %c0_81 = arith.constant 0 : index
    %157 = vector.load %arg8[%c5_79, %c0_80, %c0_81] : memref<9x16x16xbf16, #tpu.memory_space<vmem>>, vector<1x16x16xbf16>
    %158 = vector.shape_cast %157 : vector<1x16x16xbf16> to vector<16x16xbf16>
    %cst_82 = arith.constant dense<0.000000e+00> : vector<16x256xf32>
    %159 = tpu.matmul %158, %156, %cst_82 {dimension_numbers = #tpu.dot_dimension_numbers<[1], [0], [0], [1], [0, 0, 1, 1], [], []>} : vector<16x16xbf16>, vector<16x256xbf16>, vector<16x256xf32> -> vector<16x256xf32>
    %160 = vector.broadcast %1 : vector<1x256xf32> to vector<16x256xf32>
    %161 = arith.mulf %159, %160 : vector<16x256xf32>
    %162 = arith.addf %152, %161 : vector<16x256xf32>
    %cst_83 = arith.constant 0.000000e+00 : f32
    %163 = vector.broadcast %cst_83 : f32 to vector<16x15xf32>
    %164 = vector.extract_strided_slice %110 {offsets = [0, 15], sizes = [16, 241], strides = [1, 1]} : vector<16x256xf32> to vector<16x241xf32>
    %165 = tpu.concatenate %164, %163 in 1 : vector<16x241xf32>, vector<16x15xf32> -> vector<16x256xf32>
    %166 = arith.truncf %165 : vector<16x256xf32> to vector<16x256xbf16>
    %c6_84 = arith.constant 6 : index
    %c0_85 = arith.constant 0 : index
    %c0_86 = arith.constant 0 : index
    %167 = vector.load %arg8[%c6_84, %c0_85, %c0_86] : memref<9x16x16xbf16, #tpu.memory_space<vmem>>, vector<1x16x16xbf16>
    %168 = vector.shape_cast %167 : vector<1x16x16xbf16> to vector<16x16xbf16>
    %cst_87 = arith.constant dense<0.000000e+00> : vector<16x256xf32>
    %169 = tpu.matmul %168, %166, %cst_87 {dimension_numbers = #tpu.dot_dimension_numbers<[1], [0], [0], [1], [0, 0, 1, 1], [], []>} : vector<16x16xbf16>, vector<16x256xbf16>, vector<16x256xf32> -> vector<16x256xf32>
    %170 = vector.broadcast %0 : vector<1x256xf32> to vector<16x256xf32>
    %171 = arith.mulf %169, %170 : vector<16x256xf32>
    %172 = arith.addf %162, %171 : vector<16x256xf32>
    %cst_88 = arith.constant 0.000000e+00 : f32
    %173 = vector.broadcast %cst_88 : f32 to vector<16x16xf32>
    %174 = vector.extract_strided_slice %110 {offsets = [0, 16], sizes = [16, 240], strides = [1, 1]} : vector<16x256xf32> to vector<16x240xf32>
    %175 = tpu.concatenate %174, %173 in 1 : vector<16x240xf32>, vector<16x16xf32> -> vector<16x256xf32>
    %176 = arith.truncf %175 : vector<16x256xf32> to vector<16x256xbf16>
    %c7_89 = arith.constant 7 : index
    %c0_90 = arith.constant 0 : index
    %c0_91 = arith.constant 0 : index
    %177 = vector.load %arg8[%c7_89, %c0_90, %c0_91] : memref<9x16x16xbf16, #tpu.memory_space<vmem>>, vector<1x16x16xbf16>
    %178 = vector.shape_cast %177 : vector<1x16x16xbf16> to vector<16x16xbf16>
    %cst_92 = arith.constant dense<0.000000e+00> : vector<16x256xf32>
    %179 = tpu.matmul %178, %176, %cst_92 {dimension_numbers = #tpu.dot_dimension_numbers<[1], [0], [0], [1], [0, 0, 1, 1], [], []>} : vector<16x16xbf16>, vector<16x256xbf16>, vector<16x256xf32> -> vector<16x256xf32>
    %180 = arith.addf %172, %179 : vector<16x256xf32>
    %cst_93 = arith.constant 0.000000e+00 : f32
    %181 = vector.broadcast %cst_93 : f32 to vector<16x17xf32>
    %182 = vector.extract_strided_slice %110 {offsets = [0, 17], sizes = [16, 239], strides = [1, 1]} : vector<16x256xf32> to vector<16x239xf32>
    %183 = tpu.concatenate %182, %181 in 1 : vector<16x239xf32>, vector<16x17xf32> -> vector<16x256xf32>
    %184 = arith.truncf %183 : vector<16x256xf32> to vector<16x256xbf16>
    %c8_94 = arith.constant 8 : index
    %c0_95 = arith.constant 0 : index
    %c0_96 = arith.constant 0 : index
    %185 = vector.load %arg8[%c8_94, %c0_95, %c0_96] : memref<9x16x16xbf16, #tpu.memory_space<vmem>>, vector<1x16x16xbf16>
    %186 = vector.shape_cast %185 : vector<1x16x16xbf16> to vector<16x16xbf16>
    %cst_97 = arith.constant dense<0.000000e+00> : vector<16x256xf32>
    %187 = tpu.matmul %186, %184, %cst_97 {dimension_numbers = #tpu.dot_dimension_numbers<[1], [0], [0], [1], [0, 0, 1, 1], [], []>} : vector<16x16xbf16>, vector<16x256xbf16>, vector<16x256xf32> -> vector<16x256xf32>
    %188 = vector.broadcast %1 : vector<1x256xf32> to vector<16x256xf32>
    %189 = arith.mulf %187, %188 : vector<16x256xf32>
    %190 = arith.addf %180, %189 : vector<16x256xf32>
    %c0_98 = arith.constant 0 : index
    %c0_99 = arith.constant 0 : index
    %191 = vector.load %arg9[%c0_98, %c0_99] : memref<16x1xf32, #tpu.memory_space<vmem>>, vector<16x1xf32>
    %192 = vector.broadcast %191 : vector<16x1xf32> to vector<16x256xf32>
    %193 = arith.addf %190, %192 : vector<16x256xf32>
    %cst_100 = arith.constant 5.000000e-01 : f32
    %194 = vector.broadcast %cst_100 : f32 to vector<16x256xf32>
    %195 = arith.mulf %194, %193 : vector<16x256xf32>
    %196 = math.tanh %195 : vector<16x256xf32>
    %cst_101 = arith.constant 5.000000e-01 : f32
    %197 = vector.broadcast %cst_101 : f32 to vector<16x256xf32>
    %198 = arith.mulf %197, %196 : vector<16x256xf32>
    %cst_102 = arith.constant 5.000000e-01 : f32
    %199 = vector.broadcast %cst_102 : f32 to vector<16x256xf32>
    %200 = arith.addf %198, %199 : vector<16x256xf32>
    %201 = arith.mulf %193, %200 : vector<16x256xf32>
    %202 = arith.addf %201, %19 : vector<16x256xf32>
    %c0_103 = arith.constant 0 : index
    %c0_104 = arith.constant 0 : index
    %c0_105 = arith.constant 0 : index
    %203 = vector.load %arg10[%c0_103, %c0_104, %c0_105] : memref<3x32x16xbf16, #tpu.memory_space<vmem>>, vector<1x32x16xbf16>
    %204 = vector.shape_cast %203 : vector<1x32x16xbf16> to vector<32x16xbf16>
    %205 = arith.truncf %18 : vector<16x256xf32> to vector<16x256xbf16>
    %cst_106 = arith.constant dense<0.000000e+00> : vector<32x256xf32>
    %206 = tpu.matmul %204, %205, %cst_106 {dimension_numbers = #tpu.dot_dimension_numbers<[1], [0], [0], [1], [0, 0, 1, 1], [], []>} : vector<32x16xbf16>, vector<16x256xbf16>, vector<32x256xf32> -> vector<32x256xf32>
    %c1_107 = arith.constant 1 : index
    %c0_108 = arith.constant 0 : index
    %c0_109 = arith.constant 0 : index
    %207 = vector.load %arg10[%c1_107, %c0_108, %c0_109] : memref<3x32x16xbf16, #tpu.memory_space<vmem>>, vector<1x32x16xbf16>
    %208 = vector.shape_cast %207 : vector<1x32x16xbf16> to vector<32x16xbf16>
    %209 = arith.truncf %19 : vector<16x256xf32> to vector<16x256xbf16>
    %cst_110 = arith.constant dense<0.000000e+00> : vector<32x256xf32>
    %210 = tpu.matmul %208, %209, %cst_110 {dimension_numbers = #tpu.dot_dimension_numbers<[1], [0], [0], [1], [0, 0, 1, 1], [], []>} : vector<32x16xbf16>, vector<16x256xbf16>, vector<32x256xf32> -> vector<32x256xf32>
    %211 = arith.addf %206, %210 : vector<32x256xf32>
    %c2_111 = arith.constant 2 : index
    %c0_112 = arith.constant 0 : index
    %c0_113 = arith.constant 0 : index
    %212 = vector.load %arg10[%c2_111, %c0_112, %c0_113] : memref<3x32x16xbf16, #tpu.memory_space<vmem>>, vector<1x32x16xbf16>
    %213 = vector.shape_cast %212 : vector<1x32x16xbf16> to vector<32x16xbf16>
    %214 = arith.truncf %202 : vector<16x256xf32> to vector<16x256xbf16>
    %cst_114 = arith.constant dense<0.000000e+00> : vector<32x256xf32>
    %215 = tpu.matmul %213, %214, %cst_114 {dimension_numbers = #tpu.dot_dimension_numbers<[1], [0], [0], [1], [0, 0, 1, 1], [], []>} : vector<32x16xbf16>, vector<16x256xbf16>, vector<32x256xf32> -> vector<32x256xf32>
    %216 = arith.addf %211, %215 : vector<32x256xf32>
    %c0_115 = arith.constant 0 : index
    %c0_116 = arith.constant 0 : index
    %217 = vector.load %arg11[%c0_115, %c0_116] : memref<32x1xf32, #tpu.memory_space<vmem>>, vector<32x1xf32>
    %218 = vector.broadcast %217 : vector<32x1xf32> to vector<32x256xf32>
    %219 = arith.addf %216, %218 : vector<32x256xf32>
    %cst_117 = arith.constant 5.000000e-01 : f32
    %220 = vector.broadcast %cst_117 : f32 to vector<32x256xf32>
    %221 = arith.mulf %220, %219 : vector<32x256xf32>
    %222 = math.tanh %221 : vector<32x256xf32>
    %cst_118 = arith.constant 5.000000e-01 : f32
    %223 = vector.broadcast %cst_118 : f32 to vector<32x256xf32>
    %224 = arith.mulf %223, %222 : vector<32x256xf32>
    %cst_119 = arith.constant 5.000000e-01 : f32
    %225 = vector.broadcast %cst_119 : f32 to vector<32x256xf32>
    %226 = arith.addf %224, %225 : vector<32x256xf32>
    %227 = arith.mulf %219, %226 : vector<32x256xf32>
    %c0_120 = arith.constant 0 : index
    %c0_121 = arith.constant 0 : index
    %c0_122 = arith.constant 0 : index
    %228 = vector.load %arg12[%c0_120, %c0_121, %c0_122] : memref<1x32x256xf32, #tpu.memory_space<vmem>>, vector<1x32x256xf32>
    %229 = vector.shape_cast %228 : vector<1x32x256xf32> to vector<32x256xf32>
    %230 = vector.shape_cast %227 : vector<32x256xf32> to vector<1x32x256xf32>
    tpu.vector_store %arg12[%c0_120, %c0_121, %c0_122], %230 {strides = array<i32>} : memref<1x32x256xf32, #tpu.memory_space<vmem>>, vector<1x32x256xf32>,
    return
  }
  func.func @transform_0(%arg0: i32) -> (i32, i32, i32) {
    %c0_i32 = arith.constant 0 : i32
    %c0_i32_0 = arith.constant 0 : i32
    %c0_i32_1 = arith.constant 0 : i32
    return %arg0, %c0_i32, %c0_i32_0 : i32, i32, i32
  }
  func.func @transform_1(%arg0: i32) -> (i32, i32) {
    %c0_i32 = arith.constant 0 : i32
    %c0_i32_0 = arith.constant 0 : i32
    %c0_i32_1 = arith.constant 0 : i32
    return %c0_i32, %c0_i32_0 : i32, i32
  }
  func.func @transform_2(%arg0: i32) -> (i32, i32) {
    %c0_i32 = arith.constant 0 : i32
    %c0_i32_0 = arith.constant 0 : i32
    %c0_i32_1 = arith.constant 0 : i32
    return %c0_i32, %c0_i32_0 : i32, i32
  }
  func.func @transform_3(%arg0: i32) -> (i32, i32) {
    %c0_i32 = arith.constant 0 : i32
    %c0_i32_0 = arith.constant 0 : i32
    %c0_i32_1 = arith.constant 0 : i32
    return %c0_i32, %c0_i32_0 : i32, i32
  }
  func.func @transform_4(%arg0: i32) -> (i32, i32) {
    %c0_i32 = arith.constant 0 : i32
    %c0_i32_0 = arith.constant 0 : i32
    %c0_i32_1 = arith.constant 0 : i32
    return %c0_i32, %c0_i32_0 : i32, i32
  }
  func.func @transform_5(%arg0: i32) -> (i32, i32, i32) {
    %c0_i32 = arith.constant 0 : i32
    %c0_i32_0 = arith.constant 0 : i32
    %c0_i32_1 = arith.constant 0 : i32
    %c0_i32_2 = arith.constant 0 : i32
    return %c0_i32, %c0_i32_0, %c0_i32_1 : i32, i32, i32
  }
  func.func @transform_6(%arg0: i32) -> (i32, i32) {
    %c0_i32 = arith.constant 0 : i32
    %c0_i32_0 = arith.constant 0 : i32
    %c0_i32_1 = arith.constant 0 : i32
    return %c0_i32, %c0_i32_0 : i32, i32
  }
  func.func @transform_7(%arg0: i32) -> (i32, i32, i32) {
    %c0_i32 = arith.constant 0 : i32
    %c0_i32_0 = arith.constant 0 : i32
    %c0_i32_1 = arith.constant 0 : i32
    %c0_i32_2 = arith.constant 0 : i32
    return %c0_i32, %c0_i32_0, %c0_i32_1 : i32, i32, i32
  }
  func.func @transform_8(%arg0: i32) -> (i32, i32) {
    %c0_i32 = arith.constant 0 : i32
    %c0_i32_0 = arith.constant 0 : i32
    %c0_i32_1 = arith.constant 0 : i32
    return %c0_i32, %c0_i32_0 : i32, i32
  }
  func.func @transform_9(%arg0: i32) -> (i32, i32, i32) {
    %c0_i32 = arith.constant 0 : i32
    %c0_i32_0 = arith.constant 0 : i32
    %c0_i32_1 = arith.constant 0 : i32
    %c0_i32_2 = arith.constant 0 : i32
    return %c0_i32, %c0_i32_0, %c0_i32_1 : i32, i32, i32
  }
  func.func @transform_10(%arg0: i32) -> (i32, i32) {
    %c0_i32 = arith.constant 0 : i32
    %c0_i32_0 = arith.constant 0 : i32
    %c0_i32_1 = arith.constant 0 : i32
    return %c0_i32, %c0_i32_0 : i32, i32
  }
  func.func @transform_11(%arg0: i32) -> (i32, i32, i32) {
    %c0_i32 = arith.constant 0 : i32
    %c0_i32_0 = arith.constant 0 : i32
    %c0_i32_1 = arith.constant 0 : i32
    return %arg0, %c0_i32, %c0_i32_0 : i32, i32, i32
  }
}

</mosaic_0001>

<llo_original>
// kernel: tpu_custom_call.1
$region0: #{tpu_custom_call.1}
  #allocation0 [shape = 'u32[]', space=smem, size = 0x4, offset = 0x4, fixed_abs, tag = 'smem constant byte address 0x4 - core index']
  #allocation1 [shape = 'u32[144,128]{1,0:T(1,128)}', space=vmem, size = 0x12000, scoped, tag = 'internal scratch']
  %s0 = inlined_call_operand.vmem [shape: f32[2,32,256], index: 0, kind: input, shape index: {}]
  %s1 = inlined_call_operand.vmem [shape: f32[1,256], index: 1, kind: input, shape index: {}]
  %s2 = inlined_call_operand.vmem [shape: f32[1,256], index: 2, kind: input, shape index: {}]
  %s3 = inlined_call_operand.vmem [shape: bf16[32,32], index: 3, kind: input, shape index: {}]
  %s4 = inlined_call_operand.vmem [shape: f32[32,1], index: 4, kind: input, shape index: {}]
  %s5 = inlined_call_operand.hbm [shape: bf16[9,16,16], index: 5, kind: input, shape index: {}]
  %s6 = inlined_call_operand.vmem [shape: f32[16,1], index: 6, kind: input, shape index: {}]
  %s7 = inlined_call_operand.hbm [shape: bf16[9,16,16], index: 7, kind: input, shape index: {}]
  %s8 = inlined_call_operand.vmem [shape: f32[16,1], index: 8, kind: input, shape index: {}]
  %s9 = inlined_call_operand.vmem [shape: bf16[3,32,16], index: 9, kind: input, shape index: {}]
  %s10 = inlined_call_operand.vmem [shape: f32[32,1], index: 10, kind: input, shape index: {}]
  %s11 = inlined_call_operand.hbm [shape: f32[2,32,256], index: 11, kind: output, shape index: {}]
  %s12 = sld [smem:[#allocation0]]
  $region85: #{tpu_custom_call.1} parent=0
    _
  %s14 = ssub.s32 1, %s12
  %s15 = scalar_select 0, %s14, %s12
  $region1: #{tpu_custom_call.1} parent=0
    #allocation2 [shape = 'u8[36864]{0}', space=vmem, size = 0x9000, scoped, tag = 'input window, operand 5, single buffered']
    #allocation3 [shape = 's32[2]{0}', space=sflag, size = 0x8, scoped, tag = 'scoped memory for tpu_custom_call.1']
    #allocation4 [shape = 's32[2]{0}', space=sflag, size = 0x8, scoped, tag = 'scoped memory for tpu_custom_call.1']
    #allocation5 [shape = 'u8[36864]{0}', space=vmem, size = 0x9000, scoped, tag = 'input window, operand 7, single buffered']
    #allocation6 [shape = 's32[1]{0}', space=sflag, size = 0x4, scoped, tag = 'scoped memory for tpu_custom_call.1']
    #allocation7 [shape = 'u8[65536]{0}', space=vmem, size = 0x10000, scoped, tag = 'output window, operand 0']
    %16 = vsyncpa [#allocation3], 0
    %17 = vsyncpa [#allocation6], 0
    %18 = vsyncpa [#allocation4], 0
    %s19 = scalar_lea.sflag [#allocation4], 1
    %20 = vsyncpa %s19, 0
    loop: start=0, step=1, limit=4
    $region2: #{tpu_custom_call.1} parent=1 // loop_pre_header
      _
    $region3: #{tpu_custom_call.1} parent=1 // loop_header
      %s22 = sphi 0, %s26
      %p23 = scmp.ge.s32.totalorder %s22, 4
      %s32 = sphi 0, %s34
      %s35 = sphi 0, %s32
      %s36 = sphi 0, %s35
      %s52 = sphi 0, %s36
      %s56 = sphi 0, %s56
      %s58 = sphi 0, %s56
      %s59 = sphi 0, %s58
      %s73 = sphi 0, %s59
      %s77 = sphi 0, %s77
      %s79 = sphi 0, %s77
      %s80 = sphi 0, %s79
      %s94 = sphi 0, %s80
      %s98 = sphi 0, %s98
      %s100 = sphi 0, %s98
      %s101 = sphi 0, %s100
      %s115 = sphi 0, %s101
      %s119 = sphi 0, %s119
      %s121 = sphi 0, %s119
      %s122 = sphi 0, %s121
      %s136 = sphi 0, %s122
      %s140 = sphi 0, %s140
      %s142 = sphi 0, %s140
      %s143 = sphi 0, %s142
      %s157 = sphi 0, %s143
      %s161 = sphi 0, %s161
      %s163 = sphi 0, %s161
      %s164 = sphi 0, %s163
      %s178 = sphi 0, %s164
      %s182 = sphi 0, %s182
      %s184 = sphi 0, %s182
      %s185 = sphi 0, %s184
      %s199 = sphi 0, %s185
      %s203 = sphi 0, %s203
      %s205 = sphi 0, %s203
      %s206 = sphi 0, %s205
      %s220 = sphi 0, %s206
      %s224 = sphi 0, %s224
      %s226 = sphi 0, %s224
      %s227 = sphi 0, %s226
      %s241 = sphi 0, %s227
      %s245 = sphi 0, %s245
      %s247 = sphi 0, %s245
      %s248 = sphi 0, %s247
      %s262 = sphi 0, %s248
      %s268 = sphi 0, %s270
      %s271 = sphi 0, %s268
      %s272 = sphi 0, %s271
      %s288 = sphi 0, %s272
    $region4: #{tpu_custom_call.1} parent=1 // loop_header_branch
      %25 = sbr.rel (%p23) target = $region8
    $region5: #{tpu_custom_call.1} parent=1 // loop_body
      %s27 = ssub.s32 %s22, 1
      %s28 = ssub.s32 %s22, 2
      %s29 = sadd.s32 %s22, 1
      %s30 = ssub.s32 %s22, %s29
      %p31 = scmp.eq.s32.totalorder %s30, 0
      %s33 = sadd.s32 %s32, 1
      %s34 = scalar_select %p31, %s32, %s33
      %p37 = pneg %p31
      %p38 = scmp.eq.s32.totalorder %s22, 1
      %p39 = por %p37, %p38
      %p40 = scmp.ne.s32.totalorder %s32, %s35
      %p41 = scmp.eq.s32.totalorder %s22, 0
      %p42 = por %p40, %p41
      %p43 = scmp.ne.s32.totalorder %s32, %s35
      %p44 = scmp.eq.s32.totalorder %s27, 1
      %p45 = por %p43, %p44
      %p46 = scmp.ne.s32.totalorder %s35, %s36
      %p47 = scmp.eq.s32.totalorder %s27, 0
      %p48 = por %p46, %p47
      %p49 = scmp.ne.s32.totalorder %s35, %s36
      %p50 = scmp.eq.s32.totalorder %s28, 1
      %p51 = por %p49, %p50
      %p53 = scmp.ne.s32.totalorder %s36, %s52
      %p54 = scmp.eq.s32.totalorder %s28, 0
      %p55 = por %p53, %p54
      %s57 = sadd.s32 %s56, 1
      %p60 = scmp.eq.s32.totalorder %s22, 1
      %p61 = scmp.ne.s32.totalorder %s56, %s58
      %p62 = scmp.eq.s32.totalorder %s22, 0
      %p63 = por %p61, %p62
      %p64 = scmp.ne.s32.totalorder %s56, %s58
      %p65 = scmp.eq.s32.totalorder %s27, 1
      %p66 = por %p64, %p65
      %p67 = scmp.ne.s32.totalorder %s58, %s59
      %p68 = scmp.eq.s32.totalorder %s27, 0
      %p69 = por %p67, %p68
      %p70 = scmp.ne.s32.totalorder %s58, %s59
      %p71 = scmp.eq.s32.totalorder %s28, 1
      %p72 = por %p70, %p71
      %p74 = scmp.ne.s32.totalorder %s59, %s73
      %p75 = scmp.eq.s32.totalorder %s28, 0
      %p76 = por %p74, %p75
      %s78 = sadd.s32 %s77, 1
      %p81 = scmp.eq.s32.totalorder %s22, 1
      %p82 = scmp.ne.s32.totalorder %s77, %s79
      %p83 = scmp.eq.s32.totalorder %s22, 0
      %p84 = por %p82, %p83
      %p85 = scmp.ne.s32.totalorder %s77, %s79
      %p86 = scmp.eq.s32.totalorder %s27, 1
      %p87 = por %p85, %p86
      %p88 = scmp.ne.s32.totalorder %s79, %s80
      %p89 = scmp.eq.s32.totalorder %s27, 0
      %p90 = por %p88, %p89
      %p91 = scmp.ne.s32.totalorder %s79, %s80
      %p92 = scmp.eq.s32.totalorder %s28, 1
      %p93 = por %p91, %p92
      %p95 = scmp.ne.s32.totalorder %s80, %s94
      %p96 = scmp.eq.s32.totalorder %s28, 0
      %p97 = por %p95, %p96
      %s99 = sadd.s32 %s98, 1
      %p102 = scmp.eq.s32.totalorder %s22, 1
      %p103 = scmp.ne.s32.totalorder %s98, %s100
      %p104 = scmp.eq.s32.totalorder %s22, 0
      %p105 = por %p103, %p104
      %p106 = scmp.ne.s32.totalorder %s98, %s100
      %p107 = scmp.eq.s32.totalorder %s27, 1
      %p108 = por %p106, %p107
      %p109 = scmp.ne.s32.totalorder %s100, %s101
      %p110 = scmp.eq.s32.totalorder %s27, 0
      %p111 = por %p109, %p110
      %p112 = scmp.ne.s32.totalorder %s100, %s101
      %p113 = scmp.eq.s32.totalorder %s28, 1
      %p114 = por %p112, %p113
      %p116 = scmp.ne.s32.totalorder %s101, %s115
      %p117 = scmp.eq.s32.totalorder %s28, 0
      %p118 = por %p116, %p117
      %s120 = sadd.s32 %s119, 1
      %p123 = scmp.eq.s32.totalorder %s22, 1
      %p124 = scmp.ne.s32.totalorder %s119, %s121
      %p125 = scmp.eq.s32.totalorder %s22, 0
      %p126 = por %p124, %p125
      %p127 = scmp.ne.s32.totalorder %s119, %s121
      %p128 = scmp.eq.s32.totalorder %s27, 1
      %p129 = por %p127, %p128
      %p130 = scmp.ne.s32.totalorder %s121, %s122
      %p131 = scmp.eq.s32.totalorder %s27, 0
      %p132 = por %p130, %p131
      %p133 = scmp.ne.s32.totalorder %s121, %s122
      %p134 = scmp.eq.s32.totalorder %s28, 1
      %p135 = por %p133, %p134
      %p137 = scmp.ne.s32.totalorder %s122, %s136
      %p138 = scmp.eq.s32.totalorder %s28, 0
      %p139 = por %p137, %p138
      %s141 = sadd.s32 %s140, 1
      %p144 = scmp.eq.s32.totalorder %s22, 1
      %p145 = scmp.ne.s32.totalorder %s140, %s142
      %p146 = scmp.eq.s32.totalorder %s22, 0
      %p147 = por %p145, %p146
      %p148 = scmp.ne.s32.totalorder %s140, %s142
      %p149 = scmp.eq.s32.totalorder %s27, 1
      %p150 = por %p148, %p149
      %p151 = scmp.ne.s32.totalorder %s142, %s143
      %p152 = scmp.eq.s32.totalorder %s27, 0
      %p153 = por %p151, %p152
      %p154 = scmp.ne.s32.totalorder %s142, %s143
      %p155 = scmp.eq.s32.totalorder %s28, 1
      %p156 = por %p154, %p155
      %p158 = scmp.ne.s32.totalorder %s143, %s157
      %p159 = scmp.eq.s32.totalorder %s28, 0
      %p160 = por %p158, %p159
      %s162 = sadd.s32 %s161, 1
      %p165 = scmp.eq.s32.totalorder %s22, 1
      %p166 = scmp.ne.s32.totalorder %s161, %s163
      %p167 = scmp.eq.s32.totalorder %s22, 0
      %p168 = por %p166, %p167
      %p169 = scmp.ne.s32.totalorder %s161, %s163
      %p170 = scmp.eq.s32.totalorder %s27, 1
      %p171 = por %p169, %p170
      %p172 = scmp.ne.s32.totalorder %s163, %s164
      %p173 = scmp.eq.s32.totalorder %s27, 0
      %p174 = por %p172, %p173
      %p175 = scmp.ne.s32.totalorder %s163, %s164
      %p176 = scmp.eq.s32.totalorder %s28, 1
      %p177 = por %p175, %p176
      %p179 = scmp.ne.s32.totalorder %s164, %s178
      %p180 = scmp.eq.s32.totalorder %s28, 0
      %p181 = por %p179, %p180
      %s183 = sadd.s32 %s182, 1
      %p186 = scmp.eq.s32.totalorder %s22, 1
      %p187 = scmp.ne.s32.totalorder %s182, %s184
      %p188 = scmp.eq.s32.totalorder %s22, 0
      %p189 = por %p187, %p188
      %p190 = scmp.ne.s32.totalorder %s182, %s184
      %p191 = scmp.eq.s32.totalorder %s27, 1
      %p192 = por %p190, %p191
      %p193 = scmp.ne.s32.totalorder %s184, %s185
      %p194 = scmp.eq.s32.totalorder %s27, 0
      %p195 = por %p193, %p194
      %p196 = scmp.ne.s32.totalorder %s184, %s185
      %p197 = scmp.eq.s32.totalorder %s28, 1
      %p198 = por %p196, %p197
      %p200 = scmp.ne.s32.totalorder %s185, %s199
      %p201 = scmp.eq.s32.totalorder %s28, 0
      %p202 = por %p200, %p201
      %s204 = sadd.s32 %s203, 1
      %p207 = scmp.eq.s32.totalorder %s22, 1
      %p208 = scmp.ne.s32.totalorder %s203, %s205
      %p209 = scmp.eq.s32.totalorder %s22, 0
      %p210 = por %p208, %p209
      %p211 = scmp.ne.s32.totalorder %s203, %s205
      %p212 = scmp.eq.s32.totalorder %s27, 1
      %p213 = por %p211, %p212
      %p214 = scmp.ne.s32.totalorder %s205, %s206
      %p215 = scmp.eq.s32.totalorder %s27, 0
      %p216 = por %p214, %p215
      %p217 = scmp.ne.s32.totalorder %s205, %s206
      %p218 = scmp.eq.s32.totalorder %s28, 1
      %p219 = por %p217, %p218
      %p221 = scmp.ne.s32.totalorder %s206, %s220
      %p222 = scmp.eq.s32.totalorder %s28, 0
      %p223 = por %p221, %p222
      %s225 = sadd.s32 %s224, 1
      %p228 = scmp.eq.s32.totalorder %s22, 1
      %p229 = scmp.ne.s32.totalorder %s224, %s226
      %p230 = scmp.eq.s32.totalorder %s22, 0
      %p231 = por %p229, %p230
      %p232 = scmp.ne.s32.totalorder %s224, %s226
      %p233 = scmp.eq.s32.totalorder %s27, 1
      %p234 = por %p232, %p233
      %p235 = scmp.ne.s32.totalorder %s226, %s227
      %p236 = scmp.eq.s32.totalorder %s27, 0
      %p237 = por %p235, %p236
      %p238 = scmp.ne.s32.totalorder %s226, %s227
      %p239 = scmp.eq.s32.totalorder %s28, 1
      %p240 = por %p238, %p239
      %p242 = scmp.ne.s32.totalorder %s227, %s241
      %p243 = scmp.eq.s32.totalorder %s28, 0
      %p244 = por %p242, %p243
      %s246 = sadd.s32 %s245, 1
      %p249 = scmp.eq.s32.totalorder %s22, 1
      %p250 = scmp.ne.s32.totalorder %s245, %s247
      %p251 = scmp.eq.s32.totalorder %s22, 0
      %p252 = por %p250, %p251
      %p253 = scmp.ne.s32.totalorder %s245, %s247
      %p254 = scmp.eq.s32.totalorder %s27, 1
      %p255 = por %p253, %p254
      %p256 = scmp.ne.s32.totalorder %s247, %s248
      %p257 = scmp.eq.s32.totalorder %s27, 0
      %p258 = por %p256, %p257
      %p259 = scmp.ne.s32.totalorder %s247, %s248
      %p260 = scmp.eq.s32.totalorder %s28, 1
      %p261 = por %p259, %p260
      %p263 = scmp.ne.s32.totalorder %s248, %s262
      %p264 = scmp.eq.s32.totalorder %s28, 0
      %p265 = por %p263, %p264
      %s266 = ssub.s32 %s22, %s29
      %p267 = scmp.eq.s32.totalorder %s266, 0
      %s269 = sadd.s32 %s268, 1
      %s270 = scalar_select %p267, %s268, %s269
      %p273 = pneg %p267
      %p274 = scmp.eq.s32.totalorder %s22, 1
      %p275 = por %p273, %p274
      %p276 = scmp.ne.s32.totalorder %s268, %s271
      %p277 = scmp.eq.s32.totalorder %s22, 0
      %p278 = por %p276, %p277
      %p279 = scmp.ne.s32.totalorder %s268, %s271
      %p280 = scmp.eq.s32.totalorder %s27, 1
      %p281 = por %p279, %p280
      %p282 = scmp.ne.s32.totalorder %s271, %s272
      %p283 = scmp.eq.s32.totalorder %s27, 0
      %p284 = por %p282, %p283
      %p285 = scmp.ne.s32.totalorder %s271, %s272
      %p286 = scmp.eq.s32.totalorder %s28, 1
      %p287 = por %p285, %p286
      %p289 = scmp.ne.s32.totalorder %s272, %s288
      %p290 = scmp.eq.s32.totalorder %s28, 0
      %p291 = por %p289, %p290
      %p292 = scmp.le.s32.totalorder 1, %s22
      %p293 = scmp.lt.s32.totalorder %s22, 3
      %p294 = pnand %p292, %p293
      %p295 = pneg %p294
      // Predicated region
      $region9: #{tpu_custom_call.1} parent=5 // pred_check
        _
      $region10: #{tpu_custom_call.1} parent=5 // pred_check_branch
        %297 = sbr.rel (%p294) target = $region12
      $region11: #{tpu_custom_call.1} parent=5 // pred_region
        %s298 = ssub.s32 %s22, 1
        // Predicated region
        $region13: #{tpu_custom_call.1} parent=11 // pred_check
          %p299 = pneg %p69
        $region14: #{tpu_custom_call.1} parent=11 // pred_check_branch
          %301 = sbr.rel (%p299) target = $region16
        $region15: #{tpu_custom_call.1} parent=11 // pred_region
          _
        $region16: #{tpu_custom_call.1} parent=11 // pred_fallthru
          _
        // Predicated region
        $region17: #{tpu_custom_call.1} parent=11 // pred_check
          %p302 = pneg %p90
        $region18: #{tpu_custom_call.1} parent=11 // pred_check_branch
          %304 = sbr.rel (%p302) target = $region20
        $region19: #{tpu_custom_call.1} parent=11 // pred_region
          _
        $region20: #{tpu_custom_call.1} parent=11 // pred_fallthru
          _
        // Predicated region
        $region21: #{tpu_custom_call.1} parent=11 // pred_check
          %p305 = pneg %p111
        $region22: #{tpu_custom_call.1} parent=11 // pred_check_branch
          %307 = sbr.rel (%p305) target = $region24
        $region23: #{tpu_custom_call.1} parent=11 // pred_region
          _
        $region24: #{tpu_custom_call.1} parent=11 // pred_fallthru
          _
        // Predicated region
        $region25: #{tpu_custom_call.1} parent=11 // pred_check
          %p308 = pneg %p132
        $region26: #{tpu_custom_call.1} parent=11 // pred_check_branch
          %310 = sbr.rel (%p308) target = $region28
        $region27: #{tpu_custom_call.1} parent=11 // pred_region
          _
        $region28: #{tpu_custom_call.1} parent=11 // pred_fallthru
          _
        // Predicated region
        $region29: #{tpu_custom_call.1} parent=11 // pred_check
          %p311 = pneg %p153
        $region30: #{tpu_custom_call.1} parent=11 // pred_check_branch
          %313 = sbr.rel (%p311) target = $region32
        $region31: #{tpu_custom_call.1} parent=11 // pred_region
          %s315 = ssub.s32 1152, 1152
          %316 = vsyncadd [#allocation3], %s315
          %s317 = sshll.u32 [#allocation2], 4
          %s318 = int_to_ptr.vmem [resolvable:$true] %s317
          %323 = dma.hbm_to_vmem [thread:$0]  %s5, 1152, %s318, [#allocation3], 64, 64, 4
        $region32: #{tpu_custom_call.1} parent=11 // pred_fallthru
          _
        // Predicated region
        $region33: #{tpu_custom_call.1} parent=11 // pred_check
          %p324 = pneg %p174
        $region34: #{tpu_custom_call.1} parent=11 // pred_check_branch
          %326 = sbr.rel (%p324) target = $region36
        $region35: #{tpu_custom_call.1} parent=11 // pred_region
          _
        $region36: #{tpu_custom_call.1} parent=11 // pred_fallthru
          _
        // Predicated region
        $region37: #{tpu_custom_call.1} parent=11 // pred_check
          %p327 = pneg %p195
        $region38: #{tpu_custom_call.1} parent=11 // pred_check_branch
          %329 = sbr.rel (%p327) target = $region40
        $region39: #{tpu_custom_call.1} parent=11 // pred_region
          %s331 = ssub.s32 1152, 1152
          %332 = vsyncadd [#allocation6], %s331
          %s333 = sshll.u32 [#allocation5], 4
          %s334 = int_to_ptr.vmem [resolvable:$true] %s333
          %339 = dma.hbm_to_vmem [thread:$0]  %s7, 1152, %s334, [#allocation6], 64, 64, 4
        $region40: #{tpu_custom_call.1} parent=11 // pred_fallthru
          _
        // Predicated region
        $region41: #{tpu_custom_call.1} parent=11 // pred_check
          %p340 = pneg %p216
        $region42: #{tpu_custom_call.1} parent=11 // pred_check_branch
          %342 = sbr.rel (%p340) target = $region44
        $region43: #{tpu_custom_call.1} parent=11 // pred_region
          _
        $region44: #{tpu_custom_call.1} parent=11 // pred_fallthru
          _
        // Predicated region
        $region45: #{tpu_custom_call.1} parent=11 // pred_check
          %p343 = pneg %p237
        $region46: #{tpu_custom_call.1} parent=11 // pred_check_branch
          %345 = sbr.rel (%p343) target = $region48
        $region47: #{tpu_custom_call.1} parent=11 // pred_region
          _
        $region48: #{tpu_custom_call.1} parent=11 // pred_fallthru
          _
        // Predicated region
        $region49: #{tpu_custom_call.1} parent=11 // pred_check
          %p346 = pneg %p258
        $region50: #{tpu_custom_call.1} parent=11 // pred_check_branch
          %348 = sbr.rel (%p346) target = $region52
        $region51: #{tpu_custom_call.1} parent=11 // pred_region
          _
        $region52: #{tpu_custom_call.1} parent=11 // pred_fallthru
          _
      $region12: #{tpu_custom_call.1} parent=5 // pred_fallthru
        _
      %p349 = scmp.lt.s32.totalorder %s22, 2
      // Predicated region
      $region53: #{tpu_custom_call.1} parent=5 // pred_check
        %p350 = pneg %p349
      $region54: #{tpu_custom_call.1} parent=5 // pred_check_branch
        %352 = sbr.rel (%p350) target = $region56
      $region55: #{tpu_custom_call.1} parent=5 // pred_region
        // Predicated region
        $region57: #{tpu_custom_call.1} parent=55 // pred_check
          %p353 = pneg %p42
        $region58: #{tpu_custom_call.1} parent=55 // pred_check_branch
          %355 = sbr.rel (%p353) target = $region60
        $region59: #{tpu_custom_call.1} parent=55 // pred_region
          %p356 = scmp.lt.s32.totalorder %s22, 1
          %s357 = scalar_select %p356, %s22, 1
          %s358 = smul.addr %s357, 8
          %s359 = smul.addr %s358, 8
          %s360 = scalar_lea.vmem %s0, %s359
        $region60: #{tpu_custom_call.1} parent=55 // pred_fallthru
          _
      $region56: #{tpu_custom_call.1} parent=5 // pred_fallthru
        _
      %p361 = scmp.le.s32.totalorder 1, %s22
      %p362 = scmp.lt.s32.totalorder %s22, 3
      %p363 = pnand %p361, %p362
      %p364 = pneg %p363
      // Predicated region
      $region61: #{tpu_custom_call.1} parent=5 // pred_check
        _
      $region62: #{tpu_custom_call.1} parent=5 // pred_check_branch
        %366 = sbr.rel (%p363) target = $region64
      $region63: #{tpu_custom_call.1} parent=5 // pred_region
        %s367 = ssub.s32 %s22, 1
        // Predicated region
        $region65: #{tpu_custom_call.1} parent=63 // pred_check
          %p368 = pneg %p153
        $region66: #{tpu_custom_call.1} parent=63 // pred_check_branch
          %370 = sbr.rel (%p368) target = $region68
        $region67: #{tpu_custom_call.1} parent=63 // pred_region
          %371 = dma.done [#allocation3], 1152
        $region68: #{tpu_custom_call.1} parent=63 // pred_fallthru
          _
        // Predicated region
        $region69: #{tpu_custom_call.1} parent=63 // pred_check
          %p372 = pneg %p195
        $region70: #{tpu_custom_call.1} parent=63 // pred_check_branch
          %374 = sbr.rel (%p372) target = $region72
        $region71: #{tpu_custom_call.1} parent=63 // pred_region
          %375 = dma.done [#allocation6], 1152
        $region72: #{tpu_custom_call.1} parent=63 // pred_fallthru
          _
        %p376 = scmp.lt.s32.totalorder %s27, 1
        %s377 = scalar_select %p376, %s27, 1
        %s378 = smul.addr %s377, 8
        %s379 = smul.addr %s378, 8
        %s380 = scalar_lea.vmem %s0, %s379
        %p381 = pneg %p48
        %p382 = pneg %p45
        %p383 = pneg %p69
        %p384 = pneg %p66
        %p385 = pneg %p90
        %p386 = pneg %p87
        %p387 = pneg %p111
        %p388 = pneg %p108
        %p389 = pneg %p132
        %p390 = pneg %p129
        %p391 = pneg %p153
        %p392 = pneg %p150
        %p393 = pneg %p174
        %p394 = pneg %p171
        %p395 = pneg %p195
        %p396 = pneg %p192
        %p397 = pneg %p216
        %p398 = pneg %p213
        %p399 = pneg %p237
        %p400 = pneg %p234
        %p401 = pneg %p258
        %p402 = pneg %p255
        %p403 = pneg %p284
        %p404 = pneg %p281
        %s405 = sand.u32 %s271, 1
        %s406 = scalar_lea.sflag [#allocation4], %s405
        %s407 = sand.u32 %s271, 1
        %s408 = smul.addr %s407, 64
        %s409 = scalar_lea.vmem [#allocation7], %s408
        %p410 = scmp.lt.s32.totalorder %s27, 1
        %s411 = scalar_select %p410, %s27, 1
        %s412 = smul.addr %s411, 8
        %s413 = smul.addr %s412, 8
        %s414 = scalar_lea.vmem %s0, %s413
        %v416 = vld [vmem:[%s1] sm:$0x3]
        %v417 = vld [vmem:[%s2] sm:$0x3]
        %v418 = vld [vmem:[%s414] sm:$0xff]
        %v419 = vld [vmem:[%s414 + $0x8] sm:$0xff]
        %v420 = vld [vmem:[%s414 + $0x10] sm:$0xff]
        %v421 = vld [vmem:[%s414 + $0x18] sm:$0xff]
        %v422 = vld [vmem:[%s414 + $0x20] sm:$0xff]
        %v423 = vld [vmem:[%s414 + $0x28] sm:$0xff]
        %v424 = vld [vmem:[%s414 + $0x30] sm:$0xff]
        %v425 = vld [vmem:[%s414 + $0x38] sm:$0xff]
        %v426 = vpack.c.bf16 %v420, %v418
        %v427 = vpack.c.bf16 %v421, %v419
        %v428 = vpack.c.bf16 %v424, %v422
        %v429 = vpack.c.bf16 %v425, %v423
        %v430 = vld [vmem:[%s3] sm:$0xf]
        %v431 = vld [vmem:[%s3 + $0x4] sm:$0xf]
        %v432 = vld [vmem:[%s3 + $0x8] sm:$0xf]
        %v433 = vld [vmem:[%s3 + $0xc] sm:$0xf]
        %v434 = vld [vmem:[%s4] sm:$0xff]
        %v435 = vld [vmem:[%s4 + $0x8] sm:$0xff]
        %v436 = vld [vmem:[%s4 + $0x10] sm:$0xff]
        %v437 = vld [vmem:[%s4 + $0x18] sm:$0xff]
        %439 = vset.pattern.permute.xlu0 0
        %440 = vperm.xlu0 %439, %v434
        %v441 = vpop.permute.xlu0 %440
        %444 = vset.pattern.permute.xlu0 0
        %445 = vperm.xlu0 %444, %v435
        %v446 = vpop.permute.xlu0 %445
        %449 = vset.pattern.permute.xlu0 0
        %450 = vperm.xlu0 %449, %v436
        %v451 = vpop.permute.xlu0 %450
        %454 = vset.pattern.permute.xlu0 0
        %455 = vperm.xlu0 %454, %v437
        %v456 = vpop.permute.xlu0 %455
        %v462 = vunpack.c.l.b16 %v430
        %v463 = vunpack.c.l.b16 %v431
        %v464 = vunpack.c.l.b16 %v432
        %v465 = vunpack.c.l.b16 %v433
        %v466 = vpack.c.b16 %v463, %v462
        %v467 = vpack.c.b16 %v465, %v464
        %vm468 = vcmask 261120
        %v470 = vsel %vm468, %v466, 0
        %v473 = vsel %vm468, %v467, 0
        %475 = vmatprep.subr.bf16.mxu0 0
        %476 = vmatpush1.bf16.msra.mxu0 0
        %477 = vmatprep.subr.bf16.mxu0 0
        %478 = vmatpush1.bf16.msra.mxu0 0
        %479 = vmatprep.subr.bf16.mxu0 0
        %480 = vmatpush1.bf16.msra.mxu0 0
        %481 = vmatprep.subr.bf16.mxu0 0
        %482 = vmatpush1.bf16.msra.mxu0 0
        %483 = vmatprep.subr.bf16.mxu0 0
        %484 = vmatpush1.bf16.msra.mxu0 0
        %485 = vmatprep.subr.bf16.mxu0 0
        %486 = vmatpush1.bf16.msra.mxu0 0
        %487 = vmatprep.subr.bf16.mxu0 %v429
        %488 = vmatpush1.bf16.msra.mxu0 %v428
        %489 = vmatprep.subr.bf16.mxu0 %v427
        %490 = vmatpush1.bf16.msra.mxu0 %v426
        %491 = vmatprep.subr.bf16.mxu0 0
        %492 = vmatpush2.bf16.msra.mxu0 0
        %493 = vmatprep.subr.bf16.mxu0 0
        %494 = vmatpush2.bf16.msra.mxu0 0
        %495 = vmatprep.subr.bf16.mxu0 0
        %496 = vmatpush2.bf16.msra.mxu0 0
        %497 = vmatprep.subr.bf16.mxu0 0
        %498 = vmatpush2.bf16.msra.mxu0 0
        %499 = vmatprep.subr.bf16.mxu0 0
        %500 = vmatpush2.bf16.msra.mxu0 0
        %501 = vmatprep.subr.bf16.mxu0 0
        %502 = vmatpush2.bf16.msra.mxu0 0
        %503 = vmatprep.subr.bf16.mxu0 0
        %504 = vmatpush2.bf16.msra.mxu0 0
        %505 = vmatprep.subr.bf16.mxu0 0
        %506 = vmatpush2.bf16.msra.mxu0 0
        %507 = vmatprep.mubr.bf16.mxu0 0
        %508 = vmatmul.mubr.bf16.gmra.mxu0 %v470
        %v509 = vpop.f32.mrf.mxu0
        %v510 = vadd.f32 %v441, %v509
        %v511 = vpop.f32.mrf.mxu0
        %v512 = vadd.f32 %v441, %v511
        %v513 = vpop.f32.mrf.mxu0
        %v514 = vadd.f32 %v446, %v513
        %v515 = vpop.f32.mrf.mxu0
        %v516 = vadd.f32 %v446, %v515
        %517 = vmatprep.mubr.bf16.mxu0 0
        %518 = vmatmul.mubr.bf16.gmra.mxu0 %v473
        %v519 = vpop.f32.mrf.mxu0
        %v520 = vadd.f32 %v451, %v519
        %v521 = vpop.f32.mrf.mxu0
        %v522 = vadd.f32 %v451, %v521
        %v523 = vpop.f32.mrf.mxu0
        %v524 = vadd.f32 %v456, %v523
        %v525 = vpop.f32.mrf.mxu0
        %v526 = vadd.f32 %v456, %v525
        %527 = vdwg.mxu0
        %v528 = vmul.f32 %v510, 0.5
        %v529 = vmul.f32 %v512, 0.5
        %v530 = vmul.f32 %v514, 0.5
        %v531 = vmul.f32 %v516, 0.5
        %v532 = vmul.f32 %v520, 0.5
        %v533 = vmul.f32 %v522, 0.5
        %v534 = vmul.f32 %v524, 0.5
        %v535 = vmul.f32 %v526, 0.5
        %v536 = vtanh.pop %v528
        %v537 = vtanh.pop %v529
        %v538 = vtanh.pop %v530
        %v539 = vtanh.pop %v531
        %v540 = vtanh.pop %v532
        %v541 = vtanh.pop %v533
        %v542 = vtanh.pop %v534
        %v543 = vtanh.pop %v535
        %v544 = vmul.f32 %v536, 0.5
        %v545 = vmul.f32 %v537, 0.5
        %v546 = vmul.f32 %v538, 0.5
        %v547 = vmul.f32 %v539, 0.5
        %v548 = vmul.f32 %v540, 0.5
        %v549 = vmul.f32 %v541, 0.5
        %v550 = vmul.f32 %v542, 0.5
        %v551 = vmul.f32 %v543, 0.5
        %v552 = vadd.f32 %v544, 0.5
        %v553 = vadd.f32 %v545, 0.5
        %v554 = vadd.f32 %v546, 0.5
        %v555 = vadd.f32 %v547, 0.5
        %v556 = vadd.f32 %v548, 0.5
        %v557 = vadd.f32 %v549, 0.5
        %v558 = vadd.f32 %v550, 0.5
        %v559 = vadd.f32 %v551, 0.5
        %v560 = vmul.f32 %v510, %v552
        %v561 = vmul.f32 %v512, %v553
        %v562 = vmul.f32 %v514, %v554
        %v563 = vmul.f32 %v516, %v555
        %v564 = vmul.f32 %v520, %v556
        %v565 = vmul.f32 %v522, %v557
        %v566 = vmul.f32 %v524, %v558
        %v567 = vmul.f32 %v526, %v559
        %572 = vrot.lane.b32.xlu0 %v564, 17
        %v573 = vpop.permute.xlu0 %572
        %574 = vrot.lane.b32.xlu0 %v565, 17
        %v575 = vpop.permute.xlu0 %574
        %576 = vrot.lane.b32.xlu0 %v566, 17
        %v577 = vpop.permute.xlu0 %576
        %578 = vrot.lane.b32.xlu0 %v567, 17
        %v579 = vpop.permute.xlu0 %578
        %vm580 = vcmask 138240
        %v581 = vsel %vm580, %v573, %v575
        %v582 = vsel %vm580, %v577, %v579
        %v587 = vsel %vm580, 0.0, %v573
        %v588 = vsel %vm580, 0.0, %v577
        %v589 = vpack.c.bf16 %v588, %v587
        %v590 = vpack.c.bf16 %v582, %v581
        %v591 = vld [vmem:[#allocation2] sm:$0xf]
        %v592 = vld [vmem:[#allocation2 + $0x4] sm:$0xf]
        %v595 = vunpack.c.l.b16 %v591
        %v596 = vunpack.c.l.b16 %v592
        %v597 = vpack.c.b16 %v596, %v595
        %vm598 = vcmask 130048
        %v600 = vsel %vm598, %v597, 0
        %602 = vmatprep.subr.bf16.mxu0 0
        %603 = vmatpush1.bf16.msra.mxu0 0
        %604 = vmatprep.subr.bf16.mxu0 0
        %605 = vmatpush1.bf16.msra.mxu0 0
        %606 = vmatprep.subr.bf16.mxu0 0
        %607 = vmatpush1.bf16.msra.mxu0 0
        %608 = vmatprep.subr.bf16.mxu0 0
        %609 = vmatpush1.bf16.msra.mxu0 0
        %610 = vmatprep.subr.bf16.mxu0 0
        %611 = vmatpush1.bf16.msra.mxu0 0
        %612 = vmatprep.subr.bf16.mxu0 0
        %613 = vmatpush1.bf16.msra.mxu0 0
        %614 = vmatprep.subr.bf16.mxu0 0
        %615 = vmatpush1.bf16.msra.mxu0 0
        %616 = vmatprep.subr.bf16.mxu0 %v590
        %617 = vmatpush1.bf16.msra.mxu0 %v589
        %618 = vmatprep.subr.bf16.mxu0 0
        %619 = vmatpush2.bf16.msra.mxu0 0
        %620 = vmatprep.subr.bf16.mxu0 0
        %621 = vmatpush2.bf16.msra.mxu0 0
        %622 = vmatprep.subr.bf16.mxu0 0
        %623 = vmatpush2.bf16.msra.mxu0 0
        %624 = vmatprep.subr.bf16.mxu0 0
        %625 = vmatpush2.bf16.msra.mxu0 0
        %626 = vmatprep.subr.bf16.mxu0 0
        %627 = vmatpush2.bf16.msra.mxu0 0
        %628 = vmatprep.subr.bf16.mxu0 0
        %629 = vmatpush2.bf16.msra.mxu0 0
        %630 = vmatprep.subr.bf16.mxu0 0
        %631 = vmatpush2.bf16.msra.mxu0 0
        %632 = vmatprep.subr.bf16.mxu0 0
        %633 = vmatpush2.bf16.msra.mxu0 0
        %634 = vmatprep.mubr.bf16.mxu0 0
        %635 = vmatmul.mubr.bf16.gmra.mxu0 %v600
        %v636 = vpop.f32.mrf.mxu0
        %v637 = vadd.f32 0.0, %v636
        %v638 = vpop.f32.mrf.mxu0
        %v639 = vadd.f32 0.0, %v638
        %v640 = vpop.f32.mrf.mxu0
        %v641 = vadd.f32 0.0, %v640
        %v642 = vpop.f32.mrf.mxu0
        %v643 = vadd.f32 0.0, %v642
        %644 = vdwg.mxu0
        %v646 = vlaneseq
        %v647 = vshrl.u32 %v646, 7
        %v648 = vsub.s32 0, %v647
        %v649 = vrot.slane %v416, %v648
        %v650 = vlaneseq
        %v651 = vshrl.u32 %v650, 7
        %v652 = vsub.s32 1, %v651
        %v653 = vrot.slane %v416, %v652
        %v656 = vmul.f32 %v637, %v649
        %v657 = vmul.f32 %v639, %v653
        %v658 = vmul.f32 %v641, %v649
        %v659 = vmul.f32 %v643, %v653
        %660 = vrot.lane.b32.xlu0 %v564, 16
        %v661 = vpop.permute.xlu0 %660
        %662 = vrot.lane.b32.xlu0 %v565, 16
        %v663 = vpop.permute.xlu0 %662
        %664 = vrot.lane.b32.xlu0 %v566, 16
        %v665 = vpop.permute.xlu0 %664
        %666 = vrot.lane.b32.xlu0 %v567, 16
        %v667 = vpop.permute.xlu0 %666
        %v668 = vsel %vm598, %v661, %v663
        %v669 = vsel %vm598, %v665, %v667
        %v674 = vsel %vm598, 0.0, %v661
        %v675 = vsel %vm598, 0.0, %v665
        %v676 = vpack.c.bf16 %v675, %v674
        %v677 = vpack.c.bf16 %v669, %v668
        %s678 = scalar_lea.vmem [#allocation2], 8
        %v679 = vld [vmem:[%s678] sm:$0xf]
        %v680 = vld [vmem:[%s678 + $0x4] sm:$0xf]
        %v683 = vunpack.c.l.b16 %v679
        %v684 = vunpack.c.l.b16 %v680
        %v685 = vpack.c.b16 %v684, %v683
        %v687 = vsel %vm598, %v685, 0
        %689 = vmatprep.subr.bf16.mxu0 0
        %690 = vmatpush1.bf16.msra.mxu0 0
        %691 = vmatprep.subr.bf16.mxu0 0
        %692 = vmatpush1.bf16.msra.mxu0 0
        %693 = vmatprep.subr.bf16.mxu0 0
        %694 = vmatpush1.bf16.msra.mxu0 0
        %695 = vmatprep.subr.bf16.mxu0 0
        %696 = vmatpush1.bf16.msra.mxu0 0
        %697 = vmatprep.subr.bf16.mxu0 0
        %698 = vmatpush1.bf16.msra.mxu0 0
        %699 = vmatprep.subr.bf16.mxu0 0
        %700 = vmatpush1.bf16.msra.mxu0 0
        %701 = vmatprep.subr.bf16.mxu0 0
        %702 = vmatpush1.bf16.msra.mxu0 0
        %703 = vmatprep.subr.bf16.mxu0 %v677
        %704 = vmatpush1.bf16.msra.mxu0 %v676
        %705 = vmatprep.subr.bf16.mxu0 0
        %706 = vmatpush2.bf16.msra.mxu0 0
        %707 = vmatprep.subr.bf16.mxu0 0
        %708 = vmatpush2.bf16.msra.mxu0 0
        %709 = vmatprep.subr.bf16.mxu0 0
        %710 = vmatpush2.bf16.msra.mxu0 0
        %711 = vmatprep.subr.bf16.mxu0 0
        %712 = vmatpush2.bf16.msra.mxu0 0
        %713 = vmatprep.subr.bf16.mxu0 0
        %714 = vmatpush2.bf16.msra.mxu0 0
        %715 = vmatprep.subr.bf16.mxu0 0
        %716 = vmatpush2.bf16.msra.mxu0 0
        %717 = vmatprep.subr.bf16.mxu0 0
        %718 = vmatpush2.bf16.msra.mxu0 0
        %719 = vmatprep.subr.bf16.mxu0 0
        %720 = vmatpush2.bf16.msra.mxu0 0
        %721 = vmatprep.mubr.bf16.mxu0 0
        %722 = vmatmul.mubr.bf16.gmra.mxu0 %v687
        %v723 = vpop.f32.mrf.mxu0
        %v724 = vadd.f32 0.0, %v723
        %v725 = vpop.f32.mrf.mxu0
        %v726 = vadd.f32 0.0, %v725
        %v727 = vpop.f32.mrf.mxu0
        %v728 = vadd.f32 0.0, %v727
        %v729 = vpop.f32.mrf.mxu0
        %v730 = vadd.f32 0.0, %v729
        %731 = vdwg.mxu0
        %v732 = vadd.f32 %v656, %v724
        %v733 = vadd.f32 %v657, %v726
        %v734 = vadd.f32 %v658, %v728
        %v735 = vadd.f32 %v659, %v730
        %736 = vrot.lane.b32.xlu0 %v564, 15
        %v737 = vpop.permute.xlu0 %736
        %738 = vrot.lane.b32.xlu0 %v565, 15
        %v739 = vpop.permute.xlu0 %738
        %740 = vrot.lane.b32.xlu0 %v566, 15
        %v741 = vpop.permute.xlu0 %740
        %742 = vrot.lane.b32.xlu0 %v567, 15
        %v743 = vpop.permute.xlu0 %742
        %vm744 = vcmask 121856
        %v745 = vsel %vm744, %v737, %v739
        %v746 = vsel %vm744, %v741, %v743
        %v751 = vsel %vm744, 0.0, %v737
        %v752 = vsel %vm744, 0.0, %v741
        %v753 = vpack.c.bf16 %v752, %v751
        %v754 = vpack.c.bf16 %v746, %v745
        %s755 = scalar_lea.vmem [#allocation2], 16
        %v756 = vld [vmem:[%s755] sm:$0xf]
        %v757 = vld [vmem:[%s755 + $0x4] sm:$0xf]
        %v760 = vunpack.c.l.b16 %v756
        %v761 = vunpack.c.l.b16 %v757
        %v762 = vpack.c.b16 %v761, %v760
        %v764 = vsel %vm598, %v762, 0
        %766 = vmatprep.subr.bf16.mxu0 0
        %767 = vmatpush1.bf16.msra.mxu0 0
        %768 = vmatprep.subr.bf16.mxu0 0
        %769 = vmatpush1.bf16.msra.mxu0 0
        %770 = vmatprep.subr.bf16.mxu0 0
        %771 = vmatpush1.bf16.msra.mxu0 0
        %772 = vmatprep.subr.bf16.mxu0 0
        %773 = vmatpush1.bf16.msra.mxu0 0
        %774 = vmatprep.subr.bf16.mxu0 0
        %775 = vmatpush1.bf16.msra.mxu0 0
        %776 = vmatprep.subr.bf16.mxu0 0
        %777 = vmatpush1.bf16.msra.mxu0 0
        %778 = vmatprep.subr.bf16.mxu0 0
        %779 = vmatpush1.bf16.msra.mxu0 0
        %780 = vmatprep.subr.bf16.mxu0 %v754
        %781 = vmatpush1.bf16.msra.mxu0 %v753
        %782 = vmatprep.subr.bf16.mxu0 0
        %783 = vmatpush2.bf16.msra.mxu0 0
        %784 = vmatprep.subr.bf16.mxu0 0
        %785 = vmatpush2.bf16.msra.mxu0 0
        %786 = vmatprep.subr.bf16.mxu0 0
        %787 = vmatpush2.bf16.msra.mxu0 0
        %788 = vmatprep.subr.bf16.mxu0 0
        %789 = vmatpush2.bf16.msra.mxu0 0
        %790 = vmatprep.subr.bf16.mxu0 0
        %791 = vmatpush2.bf16.msra.mxu0 0
        %792 = vmatprep.subr.bf16.mxu0 0
        %793 = vmatpush2.bf16.msra.mxu0 0
        %794 = vmatprep.subr.bf16.mxu0 0
        %795 = vmatpush2.bf16.msra.mxu0 0
        %796 = vmatprep.subr.bf16.mxu0 0
        %797 = vmatpush2.bf16.msra.mxu0 0
        %798 = vmatprep.mubr.bf16.mxu0 0
        %799 = vmatmul.mubr.bf16.gmra.mxu0 %v764
        %v800 = vpop.f32.mrf.mxu0
        %v801 = vadd.f32 0.0, %v800
        %v802 = vpop.f32.mrf.mxu0
        %v803 = vadd.f32 0.0, %v802
        %v804 = vpop.f32.mrf.mxu0
        %v805 = vadd.f32 0.0, %v804
        %v806 = vpop.f32.mrf.mxu0
        %v807 = vadd.f32 0.0, %v806
        %808 = vdwg.mxu0
        %v810 = vlaneseq
        %v811 = vshrl.u32 %v810, 7
        %v812 = vsub.s32 0, %v811
        %v813 = vrot.slane %v417, %v812
        %v814 = vlaneseq
        %v815 = vshrl.u32 %v814, 7
        %v816 = vsub.s32 1, %v815
        %v817 = vrot.slane %v417, %v816
        %v820 = vmul.f32 %v801, %v813
        %v821 = vmul.f32 %v803, %v817
        %v822 = vmul.f32 %v805, %v813
        %v823 = vmul.f32 %v807, %v817
        %v824 = vadd.f32 %v732, %v820
        %v825 = vadd.f32 %v733, %v821
        %v826 = vadd.f32 %v734, %v822
        %v827 = vadd.f32 %v735, %v823
        %828 = vrot.lane.b32.xlu0 %v564, 1
        %v829 = vpop.permute.xlu0 %828
        %830 = vrot.lane.b32.xlu0 %v565, 1
        %v831 = vpop.permute.xlu0 %830
        %832 = vrot.lane.b32.xlu0 %v566, 1
        %v833 = vpop.permute.xlu0 %832
        %834 = vrot.lane.b32.xlu0 %v567, 1
        %v835 = vpop.permute.xlu0 %834
        %vm836 = vcmask 7168
        %v837 = vsel %vm836, %v829, %v831
        %v838 = vsel %vm836, %v833, %v835
        %v843 = vsel %vm836, 0.0, %v829
        %v844 = vsel %vm836, 0.0, %v833
        %v845 = vpack.c.bf16 %v844, %v843
        %v846 = vpack.c.bf16 %v838, %v837
        %s847 = scalar_lea.vmem [#allocation2], 24
        %v848 = vld [vmem:[%s847] sm:$0xf]
        %v849 = vld [vmem:[%s847 + $0x4] sm:$0xf]
        %v852 = vunpack.c.l.b16 %v848
        %v853 = vunpack.c.l.b16 %v849
        %v854 = vpack.c.b16 %v853, %v852
        %v856 = vsel %vm598, %v854, 0
        %858 = vmatprep.subr.bf16.mxu0 0
        %859 = vmatpush1.bf16.msra.mxu0 0
        %860 = vmatprep.subr.bf16.mxu0 0
        %861 = vmatpush1.bf16.msra.mxu0 0
        %862 = vmatprep.subr.bf16.mxu0 0
        %863 = vmatpush1.bf16.msra.mxu0 0
        %864 = vmatprep.subr.bf16.mxu0 0
        %865 = vmatpush1.bf16.msra.mxu0 0
        %866 = vmatprep.subr.bf16.mxu0 0
        %867 = vmatpush1.bf16.msra.mxu0 0
        %868 = vmatprep.subr.bf16.mxu0 0
        %869 = vmatpush1.bf16.msra.mxu0 0
        %870 = vmatprep.subr.bf16.mxu0 0
        %871 = vmatpush1.bf16.msra.mxu0 0
        %872 = vmatprep.subr.bf16.mxu0 %v846
        %873 = vmatpush1.bf16.msra.mxu0 %v845
        %874 = vmatprep.subr.bf16.mxu0 0
        %875 = vmatpush2.bf16.msra.mxu0 0
        %876 = vmatprep.subr.bf16.mxu0 0
        %877 = vmatpush2.bf16.msra.mxu0 0
        %878 = vmatprep.subr.bf16.mxu0 0
        %879 = vmatpush2.bf16.msra.mxu0 0
        %880 = vmatprep.subr.bf16.mxu0 0
        %881 = vmatpush2.bf16.msra.mxu0 0
        %882 = vmatprep.subr.bf16.mxu0 0
        %883 = vmatpush2.bf16.msra.mxu0 0
        %884 = vmatprep.subr.bf16.mxu0 0
        %885 = vmatpush2.bf16.msra.mxu0 0
        %886 = vmatprep.subr.bf16.mxu0 0
        %887 = vmatpush2.bf16.msra.mxu0 0
        %888 = vmatprep.subr.bf16.mxu0 0
        %889 = vmatpush2.bf16.msra.mxu0 0
        %890 = vmatprep.mubr.bf16.mxu0 0
        %891 = vmatmul.mubr.bf16.gmra.mxu0 %v856
        %v892 = vpop.f32.mrf.mxu0
        %v893 = vadd.f32 0.0, %v892
        %v894 = vpop.f32.mrf.mxu0
        %v895 = vadd.f32 0.0, %v894
        %v896 = vpop.f32.mrf.mxu0
        %v897 = vadd.f32 0.0, %v896
        %v898 = vpop.f32.mrf.mxu0
        %v899 = vadd.f32 0.0, %v898
        %900 = vdwg.mxu0
        %v901 = vmul.f32 %v893, %v649
        %v902 = vmul.f32 %v895, %v653
        %v903 = vmul.f32 %v897, %v649
        %v904 = vmul.f32 %v899, %v653
        %v905 = vadd.f32 %v824, %v901
        %v906 = vadd.f32 %v825, %v902
        %v907 = vadd.f32 %v826, %v903
        %v908 = vadd.f32 %v827, %v904
        %v909 = vpack.c.bf16 %v566, %v564
        %v910 = vpack.c.bf16 %v567, %v565
        %s911 = scalar_lea.vmem [#allocation2], 32
        %v912 = vld [vmem:[%s911] sm:$0xf]
        %v913 = vld [vmem:[%s911 + $0x4] sm:$0xf]
        %v916 = vunpack.c.l.b16 %v912
        %v917 = vunpack.c.l.b16 %v913
        %v918 = vpack.c.b16 %v917, %v916
        %v920 = vsel %vm598, %v918, 0
        %922 = vmatprep.subr.bf16.mxu0 0
        %923 = vmatpush1.bf16.msra.mxu0 0
        %924 = vmatprep.subr.bf16.mxu0 0
        %925 = vmatpush1.bf16.msra.mxu0 0
        %926 = vmatprep.subr.bf16.mxu0 0
        %927 = vmatpush1.bf16.msra.mxu0 0
        %928 = vmatprep.subr.bf16.mxu0 0
        %929 = vmatpush1.bf16.msra.mxu0 0
        %930 = vmatprep.subr.bf16.mxu0 0
        %931 = vmatpush1.bf16.msra.mxu0 0
        %932 = vmatprep.subr.bf16.mxu0 0
        %933 = vmatpush1.bf16.msra.mxu0 0
        %934 = vmatprep.subr.bf16.mxu0 0
        %935 = vmatpush1.bf16.msra.mxu0 0
        %936 = vmatprep.subr.bf16.mxu0 %v910
        %937 = vmatpush1.bf16.msra.mxu0 %v909
        %938 = vmatprep.subr.bf16.mxu0 0
        %939 = vmatpush2.bf16.msra.mxu0 0
        %940 = vmatprep.subr.bf16.mxu0 0
        %941 = vmatpush2.bf16.msra.mxu0 0
        %942 = vmatprep.subr.bf16.mxu0 0
        %943 = vmatpush2.bf16.msra.mxu0 0
        %944 = vmatprep.subr.bf16.mxu0 0
        %945 = vmatpush2.bf16.msra.mxu0 0
        %946 = vmatprep.subr.bf16.mxu0 0
        %947 = vmatpush2.bf16.msra.mxu0 0
        %948 = vmatprep.subr.bf16.mxu0 0
        %949 = vmatpush2.bf16.msra.mxu0 0
        %950 = vmatprep.subr.bf16.mxu0 0
        %951 = vmatpush2.bf16.msra.mxu0 0
        %952 = vmatprep.subr.bf16.mxu0 0
        %953 = vmatpush2.bf16.msra.mxu0 0
        %954 = vmatprep.mubr.bf16.mxu0 0
        %955 = vmatmul.mubr.bf16.gmra.mxu0 %v920
        %v956 = vpop.f32.mrf.mxu0
        %v957 = vadd.f32 0.0, %v956
        %v958 = vpop.f32.mrf.mxu0
        %v959 = vadd.f32 0.0, %v958
        %v960 = vpop.f32.mrf.mxu0
        %v961 = vadd.f32 0.0, %v960
        %v962 = vpop.f32.mrf.mxu0
        %v963 = vadd.f32 0.0, %v962
        %964 = vdwg.mxu0
        %v965 = vadd.f32 %v905, %v957
        %v966 = vadd.f32 %v906, %v959
        %v967 = vadd.f32 %v907, %v961
        %v968 = vadd.f32 %v908, %v963
        %969 = vrot.lane.b32.xlu0 %v564, 127
        %v970 = vpop.permute.xlu0 %969
        %971 = vrot.lane.b32.xlu0 %v565, 127
        %v972 = vpop.permute.xlu0 %971
        %973 = vrot.lane.b32.xlu0 %v566, 127
        %v974 = vpop.permute.xlu0 %973
        %975 = vrot.lane.b32.xlu0 %v567, 127
        %v976 = vpop.permute.xlu0 %975
        %vm977 = vcmask 1039360
        %v978 = vsel %vm977, %v970, %v972
        %v979 = vsel %vm977, %v974, %v976
        %v984 = vsel %vm977, %v972, 0.0
        %v985 = vsel %vm977, %v976, 0.0
        %v986 = vpack.c.bf16 %v979, %v978
        %v987 = vpack.c.bf16 %v985, %v984
        %s988 = scalar_lea.vmem [#allocation2], 40
        %v989 = vld [vmem:[%s988] sm:$0xf]
        %v990 = vld [vmem:[%s988 + $0x4] sm:$0xf]
        %v993 = vunpack.c.l.b16 %v989
        %v994 = vunpack.c.l.b16 %v990
        %v995 = vpack.c.b16 %v994, %v993
        %v997 = vsel %vm598, %v995, 0
        %999 = vmatprep.subr.bf16.mxu0 0
        %1000 = vmatpush1.bf16.msra.mxu0 0
        %1001 = vmatprep.subr.bf16.mxu0 0
        %1002 = vmatpush1.bf16.msra.mxu0 0
        %1003 = vmatprep.subr.bf16.mxu0 0
        %1004 = vmatpush1.bf16.msra.mxu0 0
        %1005 = vmatprep.subr.bf16.mxu0 0
        %1006 = vmatpush1.bf16.msra.mxu0 0
        %1007 = vmatprep.subr.bf16.mxu0 0
        %1008 = vmatpush1.bf16.msra.mxu0 0
        %1009 = vmatprep.subr.bf16.mxu0 0
        %1010 = vmatpush1.bf16.msra.mxu0 0
        %1011 = vmatprep.subr.bf16.mxu0 0
        %1012 = vmatpush1.bf16.msra.mxu0 0
        %1013 = vmatprep.subr.bf16.mxu0 %v987
        %1014 = vmatpush1.bf16.msra.mxu0 %v986
        %1015 = vmatprep.subr.bf16.mxu0 0
        %1016 = vmatpush2.bf16.msra.mxu0 0
        %1017 = vmatprep.subr.bf16.mxu0 0
        %1018 = vmatpush2.bf16.msra.mxu0 0
        %1019 = vmatprep.subr.bf16.mxu0 0
        %1020 = vmatpush2.bf16.msra.mxu0 0
        %1021 = vmatprep.subr.bf16.mxu0 0
        %1022 = vmatpush2.bf16.msra.mxu0 0
        %1023 = vmatprep.subr.bf16.mxu0 0
        %1024 = vmatpush2.bf16.msra.mxu0 0
        %1025 = vmatprep.subr.bf16.mxu0 0
        %1026 = vmatpush2.bf16.msra.mxu0 0
        %1027 = vmatprep.subr.bf16.mxu0 0
        %1028 = vmatpush2.bf16.msra.mxu0 0
        %1029 = vmatprep.subr.bf16.mxu0 0
        %1030 = vmatpush2.bf16.msra.mxu0 0
        %1031 = vmatprep.mubr.bf16.mxu0 0
        %1032 = vmatmul.mubr.bf16.gmra.mxu0 %v997
        %v1033 = vpop.f32.mrf.mxu0
        %v1034 = vadd.f32 0.0, %v1033
        %v1035 = vpop.f32.mrf.mxu0
        %v1036 = vadd.f32 0.0, %v1035
        %v1037 = vpop.f32.mrf.mxu0
        %v1038 = vadd.f32 0.0, %v1037
        %v1039 = vpop.f32.mrf.mxu0
        %v1040 = vadd.f32 0.0, %v1039
        %1041 = vdwg.mxu0
        %v1042 = vmul.f32 %v1034, %v813
        %v1043 = vmul.f32 %v1036, %v817
        %v1044 = vmul.f32 %v1038, %v813
        %v1045 = vmul.f32 %v1040, %v817
        %v1046 = vadd.f32 %v965, %v1042
        %v1047 = vadd.f32 %v966, %v1043
        %v1048 = vadd.f32 %v967, %v1044
        %v1049 = vadd.f32 %v968, %v1045
        %1050 = vrot.lane.b32.xlu0 %v564, 113
        %v1051 = vpop.permute.xlu0 %1050
        %1052 = vrot.lane.b32.xlu0 %v565, 113
        %v1053 = vpop.permute.xlu0 %1052
        %1054 = vrot.lane.b32.xlu0 %v566, 113
        %v1055 = vpop.permute.xlu0 %1054
        %1056 = vrot.lane.b32.xlu0 %v567, 113
        %v1057 = vpop.permute.xlu0 %1056
        %vm1058 = vcmask 924672
        %v1059 = vsel %vm1058, %v1051, %v1053
        %v1060 = vsel %vm1058, %v1055, %v1057
        %v1065 = vsel %vm1058, %v1053, 0.0
        %v1066 = vsel %vm1058, %v1057, 0.0
        %v1067 = vpack.c.bf16 %v1060, %v1059
        %v1068 = vpack.c.bf16 %v1066, %v1065
        %s1069 = scalar_lea.vmem [#allocation2], 48
        %v1070 = vld [vmem:[%s1069] sm:$0xf]
        %v1071 = vld [vmem:[%s1069 + $0x4] sm:$0xf]
        %v1074 = vunpack.c.l.b16 %v1070
        %v1075 = vunpack.c.l.b16 %v1071
        %v1076 = vpack.c.b16 %v1075, %v1074
        %v1078 = vsel %vm598, %v1076, 0
        %1080 = vmatprep.subr.bf16.mxu0 0
        %1081 = vmatpush1.bf16.msra.mxu0 0
        %1082 = vmatprep.subr.bf16.mxu0 0
        %1083 = vmatpush1.bf16.msra.mxu0 0
        %1084 = vmatprep.subr.bf16.mxu0 0
        %1085 = vmatpush1.bf16.msra.mxu0 0
        %1086 = vmatprep.subr.bf16.mxu0 0
        %1087 = vmatpush1.bf16.msra.mxu0 0
        %1088 = vmatprep.subr.bf16.mxu0 0
        %1089 = vmatpush1.bf16.msra.mxu0 0
        %1090 = vmatprep.subr.bf16.mxu0 0
        %1091 = vmatpush1.bf16.msra.mxu0 0
        %1092 = vmatprep.subr.bf16.mxu0 0
        %1093 = vmatpush1.bf16.msra.mxu0 0
        %1094 = vmatprep.subr.bf16.mxu0 %v1068
        %1095 = vmatpush1.bf16.msra.mxu0 %v1067
        %1096 = vmatprep.subr.bf16.mxu0 0
        %1097 = vmatpush2.bf16.msra.mxu0 0
        %1098 = vmatprep.subr.bf16.mxu0 0
        %1099 = vmatpush2.bf16.msra.mxu0 0
        %1100 = vmatprep.subr.bf16.mxu0 0
        %1101 = vmatpush2.bf16.msra.mxu0 0
        %1102 = vmatprep.subr.bf16.mxu0 0
        %1103 = vmatpush2.bf16.msra.mxu0 0
        %1104 = vmatprep.subr.bf16.mxu0 0
        %1105 = vmatpush2.bf16.msra.mxu0 0
        %1106 = vmatprep.subr.bf16.mxu0 0
        %1107 = vmatpush2.bf16.msra.mxu0 0
        %1108 = vmatprep.subr.bf16.mxu0 0
        %1109 = vmatpush2.bf16.msra.mxu0 0
        %1110 = vmatprep.subr.bf16.mxu0 0
        %1111 = vmatpush2.bf16.msra.mxu0 0
        %1112 = vmatprep.mubr.bf16.mxu0 0
        %1113 = vmatmul.mubr.bf16.gmra.mxu0 %v1078
        %v1114 = vpop.f32.mrf.mxu0
        %v1115 = vadd.f32 0.0, %v1114
        %v1116 = vpop.f32.mrf.mxu0
        %v1117 = vadd.f32 0.0, %v1116
        %v1118 = vpop.f32.mrf.mxu0
        %v1119 = vadd.f32 0.0, %v1118
        %v1120 = vpop.f32.mrf.mxu0
        %v1121 = vadd.f32 0.0, %v1120
        %1122 = vdwg.mxu0
        %v1123 = vmul.f32 %v1115, %v649
        %v1124 = vmul.f32 %v1117, %v653
        %v1125 = vmul.f32 %v1119, %v649
        %v1126 = vmul.f32 %v1121, %v653
        %v1127 = vadd.f32 %v1046, %v1123
        %v1128 = vadd.f32 %v1047, %v1124
        %v1129 = vadd.f32 %v1048, %v1125
        %v1130 = vadd.f32 %v1049, %v1126
        %1131 = vrot.lane.b32.xlu0 %v564, 112
        %v1132 = vpop.permute.xlu0 %1131
        %1133 = vrot.lane.b32.xlu0 %v565, 112
        %v1134 = vpop.permute.xlu0 %1133
        %1135 = vrot.lane.b32.xlu0 %v566, 112
        %v1136 = vpop.permute.xlu0 %1135
        %1137 = vrot.lane.b32.xlu0 %v567, 112
        %v1138 = vpop.permute.xlu0 %1137
        %vm1139 = vcmask 916480
        %v1140 = vsel %vm1139, %v1132, %v1134
        %v1141 = vsel %vm1139, %v1136, %v1138
        %v1146 = vsel %vm1139, %v1134, 0.0
        %v1147 = vsel %vm1139, %v1138, 0.0
        %v1148 = vpack.c.bf16 %v1141, %v1140
        %v1149 = vpack.c.bf16 %v1147, %v1146
        %s1150 = scalar_lea.vmem [#allocation2], 56
        %v1151 = vld [vmem:[%s1150] sm:$0xf]
        %v1152 = vld [vmem:[%s1150 + $0x4] sm:$0xf]
        %v1155 = vunpack.c.l.b16 %v1151
        %v1156 = vunpack.c.l.b16 %v1152
        %v1157 = vpack.c.b16 %v1156, %v1155
        %v1159 = vsel %vm598, %v1157, 0
        %1161 = vmatprep.subr.bf16.mxu0 0
        %1162 = vmatpush1.bf16.msra.mxu0 0
        %1163 = vmatprep.subr.bf16.mxu0 0
        %1164 = vmatpush1.bf16.msra.mxu0 0
        %1165 = vmatprep.subr.bf16.mxu0 0
        %1166 = vmatpush1.bf16.msra.mxu0 0
        %1167 = vmatprep.subr.bf16.mxu0 0
        %1168 = vmatpush1.bf16.msra.mxu0 0
        %1169 = vmatprep.subr.bf16.mxu0 0
        %1170 = vmatpush1.bf16.msra.mxu0 0
        %1171 = vmatprep.subr.bf16.mxu0 0
        %1172 = vmatpush1.bf16.msra.mxu0 0
        %1173 = vmatprep.subr.bf16.mxu0 0
        %1174 = vmatpush1.bf16.msra.mxu0 0
        %1175 = vmatprep.subr.bf16.mxu0 %v1149
        %1176 = vmatpush1.bf16.msra.mxu0 %v1148
        %1177 = vmatprep.subr.bf16.mxu0 0
        %1178 = vmatpush2.bf16.msra.mxu0 0
        %1179 = vmatprep.subr.bf16.mxu0 0
        %1180 = vmatpush2.bf16.msra.mxu0 0
        %1181 = vmatprep.subr.bf16.mxu0 0
        %1182 = vmatpush2.bf16.msra.mxu0 0
        %1183 = vmatprep.subr.bf16.mxu0 0
        %1184 = vmatpush2.bf16.msra.mxu0 0
        %1185 = vmatprep.subr.bf16.mxu0 0
        %1186 = vmatpush2.bf16.msra.mxu0 0
        %1187 = vmatprep.subr.bf16.mxu0 0
        %1188 = vmatpush2.bf16.msra.mxu0 0
        %1189 = vmatprep.subr.bf16.mxu0 0
        %1190 = vmatpush2.bf16.msra.mxu0 0
        %1191 = vmatprep.subr.bf16.mxu0 0
        %1192 = vmatpush2.bf16.msra.mxu0 0
        %1193 = vmatprep.mubr.bf16.mxu0 0
        %1194 = vmatmul.mubr.bf16.gmra.mxu0 %v1159
        %v1195 = vpop.f32.mrf.mxu0
        %v1196 = vadd.f32 0.0, %v1195
        %v1197 = vpop.f32.mrf.mxu0
        %v1198 = vadd.f32 0.0, %v1197
        %v1199 = vpop.f32.mrf.mxu0
        %v1200 = vadd.f32 0.0, %v1199
        %v1201 = vpop.f32.mrf.mxu0
        %v1202 = vadd.f32 0.0, %v1201
        %1203 = vdwg.mxu0
        %v1204 = vadd.f32 %v1127, %v1196
        %v1205 = vadd.f32 %v1128, %v1198
        %v1206 = vadd.f32 %v1129, %v1200
        %v1207 = vadd.f32 %v1130, %v1202
        %1208 = vrot.lane.b32.xlu0 %v564, 111
        %v1209 = vpop.permute.xlu0 %1208
        %1210 = vrot.lane.b32.xlu0 %v565, 111
        %v1211 = vpop.permute.xlu0 %1210
        %1212 = vrot.lane.b32.xlu0 %v566, 111
        %v1213 = vpop.permute.xlu0 %1212
        %1214 = vrot.lane.b32.xlu0 %v567, 111
        %v1215 = vpop.permute.xlu0 %1214
        %vm1216 = vcmask 908288
        %v1217 = vsel %vm1216, %v1209, %v1211
        %v1218 = vsel %vm1216, %v1213, %v1215
        %v1223 = vsel %vm1216, %v1211, 0.0
        %v1224 = vsel %vm1216, %v1215, 0.0
        %v1225 = vpack.c.bf16 %v1218, %v1217
        %v1226 = vpack.c.bf16 %v1224, %v1223
        %s1227 = scalar_lea.vmem [#allocation2], 64
        %v1228 = vld [vmem:[%s1227] sm:$0xf]
        %v1229 = vld [vmem:[%s1227 + $0x4] sm:$0xf]
        %v1232 = vunpack.c.l.b16 %v1228
        %v1233 = vunpack.c.l.b16 %v1229
        %v1234 = vpack.c.b16 %v1233, %v1232
        %v1236 = vsel %vm598, %v1234, 0
        %1238 = vmatprep.subr.bf16.mxu0 0
        %1239 = vmatpush1.bf16.msra.mxu0 0
        %1240 = vmatprep.subr.bf16.mxu0 0
        %1241 = vmatpush1.bf16.msra.mxu0 0
        %1242 = vmatprep.subr.bf16.mxu0 0
        %1243 = vmatpush1.bf16.msra.mxu0 0
        %1244 = vmatprep.subr.bf16.mxu0 0
        %1245 = vmatpush1.bf16.msra.mxu0 0
        %1246 = vmatprep.subr.bf16.mxu0 0
        %1247 = vmatpush1.bf16.msra.mxu0 0
        %1248 = vmatprep.subr.bf16.mxu0 0
        %1249 = vmatpush1.bf16.msra.mxu0 0
        %1250 = vmatprep.subr.bf16.mxu0 0
        %1251 = vmatpush1.bf16.msra.mxu0 0
        %1252 = vmatprep.subr.bf16.mxu0 %v1226
        %1253 = vmatpush1.bf16.msra.mxu0 %v1225
        %1254 = vmatprep.subr.bf16.mxu0 0
        %1255 = vmatpush2.bf16.msra.mxu0 0
        %1256 = vmatprep.subr.bf16.mxu0 0
        %1257 = vmatpush2.bf16.msra.mxu0 0
        %1258 = vmatprep.subr.bf16.mxu0 0
        %1259 = vmatpush2.bf16.msra.mxu0 0
        %1260 = vmatprep.subr.bf16.mxu0 0
        %1261 = vmatpush2.bf16.msra.mxu0 0
        %1262 = vmatprep.subr.bf16.mxu0 0
        %1263 = vmatpush2.bf16.msra.mxu0 0
        %1264 = vmatprep.subr.bf16.mxu0 0
        %1265 = vmatpush2.bf16.msra.mxu0 0
        %1266 = vmatprep.subr.bf16.mxu0 0
        %1267 = vmatpush2.bf16.msra.mxu0 0
        %1268 = vmatprep.subr.bf16.mxu0 0
        %1269 = vmatpush2.bf16.msra.mxu0 0
        %1270 = vmatprep.mubr.bf16.mxu0 0
        %1271 = vmatmul.mubr.bf16.gmra.mxu0 %v1236
        %v1272 = vpop.f32.mrf.mxu0
        %v1273 = vadd.f32 0.0, %v1272
        %v1274 = vpop.f32.mrf.mxu0
        %v1275 = vadd.f32 0.0, %v1274
        %v1276 = vpop.f32.mrf.mxu0
        %v1277 = vadd.f32 0.0, %v1276
        %v1278 = vpop.f32.mrf.mxu0
        %v1279 = vadd.f32 0.0, %v1278
        %1280 = vdwg.mxu0
        %v1281 = vmul.f32 %v1273, %v813
        %v1282 = vmul.f32 %v1275, %v817
        %v1283 = vmul.f32 %v1277, %v813
        %v1284 = vmul.f32 %v1279, %v817
        %v1285 = vadd.f32 %v1204, %v1281
        %v1286 = vadd.f32 %v1205, %v1282
        %v1287 = vadd.f32 %v1206, %v1283
        %v1288 = vadd.f32 %v1207, %v1284
        %v1289 = vld [vmem:[%s6] sm:$0xff]
        %v1290 = vld [vmem:[%s6 + $0x8] sm:$0xff]
        %1292 = vset.pattern.permute.xlu0 0
        %1293 = vperm.xlu0 %1292, %v1289
        %v1294 = vpop.permute.xlu0 %1293
        %1297 = vset.pattern.permute.xlu0 0
        %1298 = vperm.xlu0 %1297, %v1290
        %v1299 = vpop.permute.xlu0 %1298
        %v1301 = vadd.f32 %v1285, %v1294
        %v1302 = vadd.f32 %v1286, %v1294
        %v1303 = vadd.f32 %v1287, %v1299
        %v1304 = vadd.f32 %v1288, %v1299
        %v1305 = vmul.f32 %v1301, 0.5
        %v1306 = vmul.f32 %v1302, 0.5
        %v1307 = vmul.f32 %v1303, 0.5
        %v1308 = vmul.f32 %v1304, 0.5
        %v1309 = vtanh.pop %v1305
        %v1310 = vtanh.pop %v1306
        %v1311 = vtanh.pop %v1307
        %v1312 = vtanh.pop %v1308
        %v1313 = vmul.f32 %v1309, 0.5
        %v1314 = vmul.f32 %v1310, 0.5
        %v1315 = vmul.f32 %v1311, 0.5
        %v1316 = vmul.f32 %v1312, 0.5
        %v1317 = vadd.f32 %v1313, 0.5
        %v1318 = vadd.f32 %v1314, 0.5
        %v1319 = vadd.f32 %v1315, 0.5
        %v1320 = vadd.f32 %v1316, 0.5
        %v1321 = vmul.f32 %v1301, %v1317
        %v1322 = vmul.f32 %v1302, %v1318
        %v1323 = vmul.f32 %v1303, %v1319
        %v1324 = vmul.f32 %v1304, %v1320
        %1329 = vrot.lane.b32.xlu0 %v1321, 17
        %v1330 = vpop.permute.xlu0 %1329
        %1331 = vrot.lane.b32.xlu0 %v1322, 17
        %v1332 = vpop.permute.xlu0 %1331
        %1333 = vrot.lane.b32.xlu0 %v1323, 17
        %v1334 = vpop.permute.xlu0 %1333
        %1335 = vrot.lane.b32.xlu0 %v1324, 17
        %v1336 = vpop.permute.xlu0 %1335
        %v1337 = vsel %vm580, %v1330, %v1332
        %v1338 = vsel %vm580, %v1334, %v1336
        %v1343 = vsel %vm580, 0.0, %v1330
        %v1344 = vsel %vm580, 0.0, %v1334
        %v1345 = vpack.c.bf16 %v1344, %v1343
        %v1346 = vpack.c.bf16 %v1338, %v1337
        %v1347 = vld [vmem:[#allocation5] sm:$0xf]
        %v1348 = vld [vmem:[#allocation5 + $0x4] sm:$0xf]
        %v1351 = vunpack.c.l.b16 %v1347
        %v1352 = vunpack.c.l.b16 %v1348
        %v1353 = vpack.c.b16 %v1352, %v1351
        %v1355 = vsel %vm598, %v1353, 0
        %1357 = vmatprep.subr.bf16.mxu0 0
        %1358 = vmatpush1.bf16.msra.mxu0 0
        %1359 = vmatprep.subr.bf16.mxu0 0
        %1360 = vmatpush1.bf16.msra.mxu0 0
        %1361 = vmatprep.subr.bf16.mxu0 0
        %1362 = vmatpush1.bf16.msra.mxu0 0
        %1363 = vmatprep.subr.bf16.mxu0 0
        %1364 = vmatpush1.bf16.msra.mxu0 0
        %1365 = vmatprep.subr.bf16.mxu0 0
        %1366 = vmatpush1.bf16.msra.mxu0 0
        %1367 = vmatprep.subr.bf16.mxu0 0
        %1368 = vmatpush1.bf16.msra.mxu0 0
        %1369 = vmatprep.subr.bf16.mxu0 0
        %1370 = vmatpush1.bf16.msra.mxu0 0
        %1371 = vmatprep.subr.bf16.mxu0 %v1346
        %1372 = vmatpush1.bf16.msra.mxu0 %v1345
        %1373 = vmatprep.subr.bf16.mxu0 0
        %1374 = vmatpush2.bf16.msra.mxu0 0
        %1375 = vmatprep.subr.bf16.mxu0 0
        %1376 = vmatpush2.bf16.msra.mxu0 0
        %1377 = vmatprep.subr.bf16.mxu0 0
        %1378 = vmatpush2.bf16.msra.mxu0 0
        %1379 = vmatprep.subr.bf16.mxu0 0
        %1380 = vmatpush2.bf16.msra.mxu0 0
        %1381 = vmatprep.subr.bf16.mxu0 0
        %1382 = vmatpush2.bf16.msra.mxu0 0
        %1383 = vmatprep.subr.bf16.mxu0 0
        %1384 = vmatpush2.bf16.msra.mxu0 0
        %1385 = vmatprep.subr.bf16.mxu0 0
        %1386 = vmatpush2.bf16.msra.mxu0 0
        %1387 = vmatprep.subr.bf16.mxu0 0
        %1388 = vmatpush2.bf16.msra.mxu0 0
        %1389 = vmatprep.mubr.bf16.mxu0 0
        %1390 = vmatmul.mubr.bf16.gmra.mxu0 %v1355
        %v1391 = vpop.f32.mrf.mxu0
        %v1392 = vadd.f32 0.0, %v1391
        %v1393 = vpop.f32.mrf.mxu0
        %v1394 = vadd.f32 0.0, %v1393
        %v1395 = vpop.f32.mrf.mxu0
        %v1396 = vadd.f32 0.0, %v1395
        %v1397 = vpop.f32.mrf.mxu0
        %v1398 = vadd.f32 0.0, %v1397
        %1399 = vdwg.mxu0
        %v1400 = vmul.f32 %v1392, %v649
        %v1401 = vmul.f32 %v1394, %v653
        %v1402 = vmul.f32 %v1396, %v649
        %v1403 = vmul.f32 %v1398, %v653
        %1404 = vrot.lane.b32.xlu0 %v1321, 16
        %v1405 = vpop.permute.xlu0 %1404
        %1406 = vrot.lane.b32.xlu0 %v1322, 16
        %v1407 = vpop.permute.xlu0 %1406
        %1408 = vrot.lane.b32.xlu0 %v1323, 16
        %v1409 = vpop.permute.xlu0 %1408
        %1410 = vrot.lane.b32.xlu0 %v1324, 16
        %v1411 = vpop.permute.xlu0 %1410
        %v1412 = vsel %vm598, %v1405, %v1407
        %v1413 = vsel %vm598, %v1409, %v1411
        %v1418 = vsel %vm598, 0.0, %v1405
        %v1419 = vsel %vm598, 0.0, %v1409
        %v1420 = vpack.c.bf16 %v1419, %v1418
        %v1421 = vpack.c.bf16 %v1413, %v1412
        %s1422 = scalar_lea.vmem [#allocation5], 8
        %v1423 = vld [vmem:[%s1422] sm:$0xf]
        %v1424 = vld [vmem:[%s1422 + $0x4] sm:$0xf]
        %v1427 = vunpack.c.l.b16 %v1423
        %v1428 = vunpack.c.l.b16 %v1424
        %v1429 = vpack.c.b16 %v1428, %v1427
        %v1431 = vsel %vm598, %v1429, 0
        %1433 = vmatprep.subr.bf16.mxu0 0
        %1434 = vmatpush1.bf16.msra.mxu0 0
        %1435 = vmatprep.subr.bf16.mxu0 0
        %1436 = vmatpush1.bf16.msra.mxu0 0
        %1437 = vmatprep.subr.bf16.mxu0 0
        %1438 = vmatpush1.bf16.msra.mxu0 0
        %1439 = vmatprep.subr.bf16.mxu0 0
        %1440 = vmatpush1.bf16.msra.mxu0 0
        %1441 = vmatprep.subr.bf16.mxu0 0
        %1442 = vmatpush1.bf16.msra.mxu0 0
        %1443 = vmatprep.subr.bf16.mxu0 0
        %1444 = vmatpush1.bf16.msra.mxu0 0
        %1445 = vmatprep.subr.bf16.mxu0 0
        %1446 = vmatpush1.bf16.msra.mxu0 0
        %1447 = vmatprep.subr.bf16.mxu0 %v1421
        %1448 = vmatpush1.bf16.msra.mxu0 %v1420
        %1449 = vmatprep.subr.bf16.mxu0 0
        %1450 = vmatpush2.bf16.msra.mxu0 0
        %1451 = vmatprep.subr.bf16.mxu0 0
        %1452 = vmatpush2.bf16.msra.mxu0 0
        %1453 = vmatprep.subr.bf16.mxu0 0
        %1454 = vmatpush2.bf16.msra.mxu0 0
        %1455 = vmatprep.subr.bf16.mxu0 0
        %1456 = vmatpush2.bf16.msra.mxu0 0
        %1457 = vmatprep.subr.bf16.mxu0 0
        %1458 = vmatpush2.bf16.msra.mxu0 0
        %1459 = vmatprep.subr.bf16.mxu0 0
        %1460 = vmatpush2.bf16.msra.mxu0 0
        %1461 = vmatprep.subr.bf16.mxu0 0
        %1462 = vmatpush2.bf16.msra.mxu0 0
        %1463 = vmatprep.subr.bf16.mxu0 0
        %1464 = vmatpush2.bf16.msra.mxu0 0
        %1465 = vmatprep.mubr.bf16.mxu0 0
        %1466 = vmatmul.mubr.bf16.gmra.mxu0 %v1431
        %v1467 = vpop.f32.mrf.mxu0
        %v1468 = vadd.f32 0.0, %v1467
        %v1469 = vpop.f32.mrf.mxu0
        %v1470 = vadd.f32 0.0, %v1469
        %v1471 = vpop.f32.mrf.mxu0
        %v1472 = vadd.f32 0.0, %v1471
        %v1473 = vpop.f32.mrf.mxu0
        %v1474 = vadd.f32 0.0, %v1473
        %1475 = vdwg.mxu0
        %v1476 = vadd.f32 %v1400, %v1468
        %v1477 = vadd.f32 %v1401, %v1470
        %v1478 = vadd.f32 %v1402, %v1472
        %v1479 = vadd.f32 %v1403, %v1474
        %1480 = vrot.lane.b32.xlu0 %v1321, 15
        %v1481 = vpop.permute.xlu0 %1480
        %1482 = vrot.lane.b32.xlu0 %v1322, 15
        %v1483 = vpop.permute.xlu0 %1482
        %1484 = vrot.lane.b32.xlu0 %v1323, 15
        %v1485 = vpop.permute.xlu0 %1484
        %1486 = vrot.lane.b32.xlu0 %v1324, 15
        %v1487 = vpop.permute.xlu0 %1486
        %v1488 = vsel %vm744, %v1481, %v1483
        %v1489 = vsel %vm744, %v1485, %v1487
        %v1494 = vsel %vm744, 0.0, %v1481
        %v1495 = vsel %vm744, 0.0, %v1485
        %v1496 = vpack.c.bf16 %v1495, %v1494
        %v1497 = vpack.c.bf16 %v1489, %v1488
        %s1498 = scalar_lea.vmem [#allocation5], 16
        %v1499 = vld [vmem:[%s1498] sm:$0xf]
        %v1500 = vld [vmem:[%s1498 + $0x4] sm:$0xf]
        %v1503 = vunpack.c.l.b16 %v1499
        %v1504 = vunpack.c.l.b16 %v1500
        %v1505 = vpack.c.b16 %v1504, %v1503
        %v1507 = vsel %vm598, %v1505, 0
        %1509 = vmatprep.subr.bf16.mxu0 0
        %1510 = vmatpush1.bf16.msra.mxu0 0
        %1511 = vmatprep.subr.bf16.mxu0 0
        %1512 = vmatpush1.bf16.msra.mxu0 0
        %1513 = vmatprep.subr.bf16.mxu0 0
        %1514 = vmatpush1.bf16.msra.mxu0 0
        %1515 = vmatprep.subr.bf16.mxu0 0
        %1516 = vmatpush1.bf16.msra.mxu0 0
        %1517 = vmatprep.subr.bf16.mxu0 0
        %1518 = vmatpush1.bf16.msra.mxu0 0
        %1519 = vmatprep.subr.bf16.mxu0 0
        %1520 = vmatpush1.bf16.msra.mxu0 0
        %1521 = vmatprep.subr.bf16.mxu0 0
        %1522 = vmatpush1.bf16.msra.mxu0 0
        %1523 = vmatprep.subr.bf16.mxu0 %v1497
        %1524 = vmatpush1.bf16.msra.mxu0 %v1496
        %1525 = vmatprep.subr.bf16.mxu0 0
        %1526 = vmatpush2.bf16.msra.mxu0 0
        %1527 = vmatprep.subr.bf16.mxu0 0
        %1528 = vmatpush2.bf16.msra.mxu0 0
        %1529 = vmatprep.subr.bf16.mxu0 0
        %1530 = vmatpush2.bf16.msra.mxu0 0
        %1531 = vmatprep.subr.bf16.mxu0 0
        %1532 = vmatpush2.bf16.msra.mxu0 0
        %1533 = vmatprep.subr.bf16.mxu0 0
        %1534 = vmatpush2.bf16.msra.mxu0 0
        %1535 = vmatprep.subr.bf16.mxu0 0
        %1536 = vmatpush2.bf16.msra.mxu0 0
        %1537 = vmatprep.subr.bf16.mxu0 0
        %1538 = vmatpush2.bf16.msra.mxu0 0
        %1539 = vmatprep.subr.bf16.mxu0 0
        %1540 = vmatpush2.bf16.msra.mxu0 0
        %1541 = vmatprep.mubr.bf16.mxu0 0
        %1542 = vmatmul.mubr.bf16.gmra.mxu0 %v1507
        %v1543 = vpop.f32.mrf.mxu0
        %v1544 = vadd.f32 0.0, %v1543
        %v1545 = vpop.f32.mrf.mxu0
        %v1546 = vadd.f32 0.0, %v1545
        %v1547 = vpop.f32.mrf.mxu0
        %v1548 = vadd.f32 0.0, %v1547
        %v1549 = vpop.f32.mrf.mxu0
        %v1550 = vadd.f32 0.0, %v1549
        %1551 = vdwg.mxu0
        %v1552 = vmul.f32 %v1544, %v813
        %v1553 = vmul.f32 %v1546, %v817
        %v1554 = vmul.f32 %v1548, %v813
        %v1555 = vmul.f32 %v1550, %v817
        %v1556 = vadd.f32 %v1476, %v1552
        %v1557 = vadd.f32 %v1477, %v1553
        %v1558 = vadd.f32 %v1478, %v1554
        %v1559 = vadd.f32 %v1479, %v1555
        %1560 = vrot.lane.b32.xlu0 %v1321, 1
        %v1561 = vpop.permute.xlu0 %1560
        %1562 = vrot.lane.b32.xlu0 %v1322, 1
        %v1563 = vpop.permute.xlu0 %1562
        %1564 = vrot.lane.b32.xlu0 %v1323, 1
        %v1565 = vpop.permute.xlu0 %1564
        %1566 = vrot.lane.b32.xlu0 %v1324, 1
        %v1567 = vpop.permute.xlu0 %1566
        %v1568 = vsel %vm836, %v1561, %v1563
        %v1569 = vsel %vm836, %v1565, %v1567
        %v1574 = vsel %vm836, 0.0, %v1561
        %v1575 = vsel %vm836, 0.0, %v1565
        %v1576 = vpack.c.bf16 %v1575, %v1574
        %v1577 = vpack.c.bf16 %v1569, %v1568
        %s1578 = scalar_lea.vmem [#allocation5], 24
        %v1579 = vld [vmem:[%s1578] sm:$0xf]
        %v1580 = vld [vmem:[%s1578 + $0x4] sm:$0xf]
        %v1583 = vunpack.c.l.b16 %v1579
        %v1584 = vunpack.c.l.b16 %v1580
        %v1585 = vpack.c.b16 %v1584, %v1583
        %v1587 = vsel %vm598, %v1585, 0
        %1589 = vmatprep.subr.bf16.mxu0 0
        %1590 = vmatpush1.bf16.msra.mxu0 0
        %1591 = vmatprep.subr.bf16.mxu0 0
        %1592 = vmatpush1.bf16.msra.mxu0 0
        %1593 = vmatprep.subr.bf16.mxu0 0
        %1594 = vmatpush1.bf16.msra.mxu0 0
        %1595 = vmatprep.subr.bf16.mxu0 0
        %1596 = vmatpush1.bf16.msra.mxu0 0
        %1597 = vmatprep.subr.bf16.mxu0 0
        %1598 = vmatpush1.bf16.msra.mxu0 0
        %1599 = vmatprep.subr.bf16.mxu0 0
        %1600 = vmatpush1.bf16.msra.mxu0 0
        %1601 = vmatprep.subr.bf16.mxu0 0
        %1602 = vmatpush1.bf16.msra.mxu0 0
        %1603 = vmatprep.subr.bf16.mxu0 %v1577
        %1604 = vmatpush1.bf16.msra.mxu0 %v1576
        %1605 = vmatprep.subr.bf16.mxu0 0
        %1606 = vmatpush2.bf16.msra.mxu0 0
        %1607 = vmatprep.subr.bf16.mxu0 0
        %1608 = vmatpush2.bf16.msra.mxu0 0
        %1609 = vmatprep.subr.bf16.mxu0 0
        %1610 = vmatpush2.bf16.msra.mxu0 0
        %1611 = vmatprep.subr.bf16.mxu0 0
        %1612 = vmatpush2.bf16.msra.mxu0 0
        %1613 = vmatprep.subr.bf16.mxu0 0
        %1614 = vmatpush2.bf16.msra.mxu0 0
        %1615 = vmatprep.subr.bf16.mxu0 0
        %1616 = vmatpush2.bf16.msra.mxu0 0
        %1617 = vmatprep.subr.bf16.mxu0 0
        %1618 = vmatpush2.bf16.msra.mxu0 0
        %1619 = vmatprep.subr.bf16.mxu0 0
        %1620 = vmatpush2.bf16.msra.mxu0 0
        %1621 = vmatprep.mubr.bf16.mxu0 0
        %1622 = vmatmul.mubr.bf16.gmra.mxu0 %v1587
        %v1623 = vpop.f32.mrf.mxu0
        %v1624 = vadd.f32 0.0, %v1623
        %v1625 = vpop.f32.mrf.mxu0
        %v1626 = vadd.f32 0.0, %v1625
        %v1627 = vpop.f32.mrf.mxu0
        %v1628 = vadd.f32 0.0, %v1627
        %v1629 = vpop.f32.mrf.mxu0
        %v1630 = vadd.f32 0.0, %v1629
        %1631 = vdwg.mxu0
        %v1632 = vmul.f32 %v1624, %v649
        %v1633 = vmul.f32 %v1626, %v653
        %v1634 = vmul.f32 %v1628, %v649
        %v1635 = vmul.f32 %v1630, %v653
        %v1636 = vadd.f32 %v1556, %v1632
        %v1637 = vadd.f32 %v1557, %v1633
        %v1638 = vadd.f32 %v1558, %v1634
        %v1639 = vadd.f32 %v1559, %v1635
        %v1640 = vpack.c.bf16 %v1323, %v1321
        %v1641 = vpack.c.bf16 %v1324, %v1322
        %s1642 = scalar_lea.vmem [#allocation5], 32
        %v1643 = vld [vmem:[%s1642] sm:$0xf]
        %v1644 = vld [vmem:[%s1642 + $0x4] sm:$0xf]
        %v1647 = vunpack.c.l.b16 %v1643
        %v1648 = vunpack.c.l.b16 %v1644
        %v1649 = vpack.c.b16 %v1648, %v1647
        %v1651 = vsel %vm598, %v1649, 0
        %1653 = vmatprep.subr.bf16.mxu0 0
        %1654 = vmatpush1.bf16.msra.mxu0 0
        %1655 = vmatprep.subr.bf16.mxu0 0
        %1656 = vmatpush1.bf16.msra.mxu0 0
        %1657 = vmatprep.subr.bf16.mxu0 0
        %1658 = vmatpush1.bf16.msra.mxu0 0
        %1659 = vmatprep.subr.bf16.mxu0 0
        %1660 = vmatpush1.bf16.msra.mxu0 0
        %1661 = vmatprep.subr.bf16.mxu0 0
        %1662 = vmatpush1.bf16.msra.mxu0 0
        %1663 = vmatprep.subr.bf16.mxu0 0
        %1664 = vmatpush1.bf16.msra.mxu0 0
        %1665 = vmatprep.subr.bf16.mxu0 0
        %1666 = vmatpush1.bf16.msra.mxu0 0
        %1667 = vmatprep.subr.bf16.mxu0 %v1641
        %1668 = vmatpush1.bf16.msra.mxu0 %v1640
        %1669 = vmatprep.subr.bf16.mxu0 0
        %1670 = vmatpush2.bf16.msra.mxu0 0
        %1671 = vmatprep.subr.bf16.mxu0 0
        %1672 = vmatpush2.bf16.msra.mxu0 0
        %1673 = vmatprep.subr.bf16.mxu0 0
        %1674 = vmatpush2.bf16.msra.mxu0 0
        %1675 = vmatprep.subr.bf16.mxu0 0
        %1676 = vmatpush2.bf16.msra.mxu0 0
        %1677 = vmatprep.subr.bf16.mxu0 0
        %1678 = vmatpush2.bf16.msra.mxu0 0
        %1679 = vmatprep.subr.bf16.mxu0 0
        %1680 = vmatpush2.bf16.msra.mxu0 0
        %1681 = vmatprep.subr.bf16.mxu0 0
        %1682 = vmatpush2.bf16.msra.mxu0 0
        %1683 = vmatprep.subr.bf16.mxu0 0
        %1684 = vmatpush2.bf16.msra.mxu0 0
        %1685 = vmatprep.mubr.bf16.mxu0 0
        %1686 = vmatmul.mubr.bf16.gmra.mxu0 %v1651
        %v1687 = vpop.f32.mrf.mxu0
        %v1688 = vadd.f32 0.0, %v1687
        %v1689 = vpop.f32.mrf.mxu0
        %v1690 = vadd.f32 0.0, %v1689
        %v1691 = vpop.f32.mrf.mxu0
        %v1692 = vadd.f32 0.0, %v1691
        %v1693 = vpop.f32.mrf.mxu0
        %v1694 = vadd.f32 0.0, %v1693
        %1695 = vdwg.mxu0
        %v1696 = vadd.f32 %v1636, %v1688
        %v1697 = vadd.f32 %v1637, %v1690
        %v1698 = vadd.f32 %v1638, %v1692
        %v1699 = vadd.f32 %v1639, %v1694
        %1700 = vrot.lane.b32.xlu0 %v1321, 127
        %v1701 = vpop.permute.xlu0 %1700
        %1702 = vrot.lane.b32.xlu0 %v1322, 127
        %v1703 = vpop.permute.xlu0 %1702
        %1704 = vrot.lane.b32.xlu0 %v1323, 127
        %v1705 = vpop.permute.xlu0 %1704
        %1706 = vrot.lane.b32.xlu0 %v1324, 127
        %v1707 = vpop.permute.xlu0 %1706
        %v1708 = vsel %vm977, %v1701, %v1703
        %v1709 = vsel %vm977, %v1705, %v1707
        %v1714 = vsel %vm977, %v1703, 0.0
        %v1715 = vsel %vm977, %v1707, 0.0
        %v1716 = vpack.c.bf16 %v1709, %v1708
        %v1717 = vpack.c.bf16 %v1715, %v1714
        %s1718 = scalar_lea.vmem [#allocation5], 40
        %v1719 = vld [vmem:[%s1718] sm:$0xf]
        %v1720 = vld [vmem:[%s1718 + $0x4] sm:$0xf]
        %v1723 = vunpack.c.l.b16 %v1719
        %v1724 = vunpack.c.l.b16 %v1720
        %v1725 = vpack.c.b16 %v1724, %v1723
        %v1727 = vsel %vm598, %v1725, 0
        %1729 = vmatprep.subr.bf16.mxu0 0
        %1730 = vmatpush1.bf16.msra.mxu0 0
        %1731 = vmatprep.subr.bf16.mxu0 0
        %1732 = vmatpush1.bf16.msra.mxu0 0
        %1733 = vmatprep.subr.bf16.mxu0 0
        %1734 = vmatpush1.bf16.msra.mxu0 0
        %1735 = vmatprep.subr.bf16.mxu0 0
        %1736 = vmatpush1.bf16.msra.mxu0 0
        %1737 = vmatprep.subr.bf16.mxu0 0
        %1738 = vmatpush1.bf16.msra.mxu0 0
        %1739 = vmatprep.subr.bf16.mxu0 0
        %1740 = vmatpush1.bf16.msra.mxu0 0
        %1741 = vmatprep.subr.bf16.mxu0 0
        %1742 = vmatpush1.bf16.msra.mxu0 0
        %1743 = vmatprep.subr.bf16.mxu0 %v1717
        %1744 = vmatpush1.bf16.msra.mxu0 %v1716
        %1745 = vmatprep.subr.bf16.mxu0 0
        %1746 = vmatpush2.bf16.msra.mxu0 0
        %1747 = vmatprep.subr.bf16.mxu0 0
        %1748 = vmatpush2.bf16.msra.mxu0 0
        %1749 = vmatprep.subr.bf16.mxu0 0
        %1750 = vmatpush2.bf16.msra.mxu0 0
        %1751 = vmatprep.subr.bf16.mxu0 0
        %1752 = vmatpush2.bf16.msra.mxu0 0
        %1753 = vmatprep.subr.bf16.mxu0 0
        %1754 = vmatpush2.bf16.msra.mxu0 0
        %1755 = vmatprep.subr.bf16.mxu0 0
        %1756 = vmatpush2.bf16.msra.mxu0 0
        %1757 = vmatprep.subr.bf16.mxu0 0
        %1758 = vmatpush2.bf16.msra.mxu0 0
        %1759 = vmatprep.subr.bf16.mxu0 0
        %1760 = vmatpush2.bf16.msra.mxu0 0
        %1761 = vmatprep.mubr.bf16.mxu0 0
        %1762 = vmatmul.mubr.bf16.gmra.mxu0 %v1727
        %v1763 = vpop.f32.mrf.mxu0
        %v1764 = vadd.f32 0.0, %v1763
        %v1765 = vpop.f32.mrf.mxu0
        %v1766 = vadd.f32 0.0, %v1765
        %v1767 = vpop.f32.mrf.mxu0
        %v1768 = vadd.f32 0.0, %v1767
        %v1769 = vpop.f32.mrf.mxu0
        %v1770 = vadd.f32 0.0, %v1769
        %1771 = vdwg.mxu0
        %v1772 = vmul.f32 %v1764, %v813
        %v1773 = vmul.f32 %v1766, %v817
        %v1774 = vmul.f32 %v1768, %v813
        %v1775 = vmul.f32 %v1770, %v817
        %v1776 = vadd.f32 %v1696, %v1772
        %v1777 = vadd.f32 %v1697, %v1773
        %v1778 = vadd.f32 %v1698, %v1774
        %v1779 = vadd.f32 %v1699, %v1775
        %1780 = vrot.lane.b32.xlu0 %v1321, 113
        %v1781 = vpop.permute.xlu0 %1780
        %1782 = vrot.lane.b32.xlu0 %v1322, 113
        %v1783 = vpop.permute.xlu0 %1782
        %1784 = vrot.lane.b32.xlu0 %v1323, 113
        %v1785 = vpop.permute.xlu0 %1784
        %1786 = vrot.lane.b32.xlu0 %v1324, 113
        %v1787 = vpop.permute.xlu0 %1786
        %v1788 = vsel %vm1058, %v1781, %v1783
        %v1789 = vsel %vm1058, %v1785, %v1787
        %v1794 = vsel %vm1058, %v1783, 0.0
        %v1795 = vsel %vm1058, %v1787, 0.0
        %v1796 = vpack.c.bf16 %v1789, %v1788
        %v1797 = vpack.c.bf16 %v1795, %v1794
        %s1798 = scalar_lea.vmem [#allocation5], 48
        %v1799 = vld [vmem:[%s1798] sm:$0xf]
        %v1800 = vld [vmem:[%s1798 + $0x4] sm:$0xf]
        %v1803 = vunpack.c.l.b16 %v1799
        %v1804 = vunpack.c.l.b16 %v1800
        %v1805 = vpack.c.b16 %v1804, %v1803
        %v1807 = vsel %vm598, %v1805, 0
        %1809 = vmatprep.subr.bf16.mxu0 0
        %1810 = vmatpush1.bf16.msra.mxu0 0
        %1811 = vmatprep.subr.bf16.mxu0 0
        %1812 = vmatpush1.bf16.msra.mxu0 0
        %1813 = vmatprep.subr.bf16.mxu0 0
        %1814 = vmatpush1.bf16.msra.mxu0 0
        %1815 = vmatprep.subr.bf16.mxu0 0
        %1816 = vmatpush1.bf16.msra.mxu0 0
        %1817 = vmatprep.subr.bf16.mxu0 0
        %1818 = vmatpush1.bf16.msra.mxu0 0
        %1819 = vmatprep.subr.bf16.mxu0 0
        %1820 = vmatpush1.bf16.msra.mxu0 0
        %1821 = vmatprep.subr.bf16.mxu0 0
        %1822 = vmatpush1.bf16.msra.mxu0 0
        %1823 = vmatprep.subr.bf16.mxu0 %v1797
        %1824 = vmatpush1.bf16.msra.mxu0 %v1796
        %1825 = vmatprep.subr.bf16.mxu0 0
        %1826 = vmatpush2.bf16.msra.mxu0 0
        %1827 = vmatprep.subr.bf16.mxu0 0
        %1828 = vmatpush2.bf16.msra.mxu0 0
        %1829 = vmatprep.subr.bf16.mxu0 0
        %1830 = vmatpush2.bf16.msra.mxu0 0
        %1831 = vmatprep.subr.bf16.mxu0 0
        %1832 = vmatpush2.bf16.msra.mxu0 0
        %1833 = vmatprep.subr.bf16.mxu0 0
        %1834 = vmatpush2.bf16.msra.mxu0 0
        %1835 = vmatprep.subr.bf16.mxu0 0
        %1836 = vmatpush2.bf16.msra.mxu0 0
        %1837 = vmatprep.subr.bf16.mxu0 0
        %1838 = vmatpush2.bf16.msra.mxu0 0
        %1839 = vmatprep.subr.bf16.mxu0 0
        %1840 = vmatpush2.bf16.msra.mxu0 0
        %1841 = vmatprep.mubr.bf16.mxu0 0
        %1842 = vmatmul.mubr.bf16.gmra.mxu0 %v1807
        %v1843 = vpop.f32.mrf.mxu0
        %v1844 = vadd.f32 0.0, %v1843
        %v1845 = vpop.f32.mrf.mxu0
        %v1846 = vadd.f32 0.0, %v1845
        %v1847 = vpop.f32.mrf.mxu0
        %v1848 = vadd.f32 0.0, %v1847
        %v1849 = vpop.f32.mrf.mxu0
        %v1850 = vadd.f32 0.0, %v1849
        %1851 = vdwg.mxu0
        %v1852 = vmul.f32 %v1844, %v649
        %v1853 = vmul.f32 %v1846, %v653
        %v1854 = vmul.f32 %v1848, %v649
        %v1855 = vmul.f32 %v1850, %v653
        %v1856 = vadd.f32 %v1776, %v1852
        %v1857 = vadd.f32 %v1777, %v1853
        %v1858 = vadd.f32 %v1778, %v1854
        %v1859 = vadd.f32 %v1779, %v1855
        %1860 = vrot.lane.b32.xlu0 %v1321, 112
        %v1861 = vpop.permute.xlu0 %1860
        %1862 = vrot.lane.b32.xlu0 %v1322, 112
        %v1863 = vpop.permute.xlu0 %1862
        %1864 = vrot.lane.b32.xlu0 %v1323, 112
        %v1865 = vpop.permute.xlu0 %1864
        %1866 = vrot.lane.b32.xlu0 %v1324, 112
        %v1867 = vpop.permute.xlu0 %1866
        %v1868 = vsel %vm1139, %v1861, %v1863
        %v1869 = vsel %vm1139, %v1865, %v1867
        %v1874 = vsel %vm1139, %v1863, 0.0
        %v1875 = vsel %vm1139, %v1867, 0.0
        %v1876 = vpack.c.bf16 %v1869, %v1868
        %v1877 = vpack.c.bf16 %v1875, %v1874
        %s1878 = scalar_lea.vmem [#allocation5], 56
        %v1879 = vld [vmem:[%s1878] sm:$0xf]
        %v1880 = vld [vmem:[%s1878 + $0x4] sm:$0xf]
        %v1883 = vunpack.c.l.b16 %v1879
        %v1884 = vunpack.c.l.b16 %v1880
        %v1885 = vpack.c.b16 %v1884, %v1883
        %v1887 = vsel %vm598, %v1885, 0
        %1889 = vmatprep.subr.bf16.mxu0 0
        %1890 = vmatpush1.bf16.msra.mxu0 0
        %1891 = vmatprep.subr.bf16.mxu0 0
        %1892 = vmatpush1.bf16.msra.mxu0 0
        %1893 = vmatprep.subr.bf16.mxu0 0
        %1894 = vmatpush1.bf16.msra.mxu0 0
        %1895 = vmatprep.subr.bf16.mxu0 0
        %1896 = vmatpush1.bf16.msra.mxu0 0
        %1897 = vmatprep.subr.bf16.mxu0 0
        %1898 = vmatpush1.bf16.msra.mxu0 0
        %1899 = vmatprep.subr.bf16.mxu0 0
        %1900 = vmatpush1.bf16.msra.mxu0 0
        %1901 = vmatprep.subr.bf16.mxu0 0
        %1902 = vmatpush1.bf16.msra.mxu0 0
        %1903 = vmatprep.subr.bf16.mxu0 %v1877
        %1904 = vmatpush1.bf16.msra.mxu0 %v1876
        %1905 = vmatprep.subr.bf16.mxu0 0
        %1906 = vmatpush2.bf16.msra.mxu0 0
        %1907 = vmatprep.subr.bf16.mxu0 0
        %1908 = vmatpush2.bf16.msra.mxu0 0
        %1909 = vmatprep.subr.bf16.mxu0 0
        %1910 = vmatpush2.bf16.msra.mxu0 0
        %1911 = vmatprep.subr.bf16.mxu0 0
        %1912 = vmatpush2.bf16.msra.mxu0 0
        %1913 = vmatprep.subr.bf16.mxu0 0
        %1914 = vmatpush2.bf16.msra.mxu0 0
        %1915 = vmatprep.subr.bf16.mxu0 0
        %1916 = vmatpush2.bf16.msra.mxu0 0
        %1917 = vmatprep.subr.bf16.mxu0 0
        %1918 = vmatpush2.bf16.msra.mxu0 0
        %1919 = vmatprep.subr.bf16.mxu0 0
        %1920 = vmatpush2.bf16.msra.mxu0 0
        %1921 = vmatprep.mubr.bf16.mxu0 0
        %1922 = vmatmul.mubr.bf16.gmra.mxu0 %v1887
        %v1923 = vpop.f32.mrf.mxu0
        %v1924 = vadd.f32 0.0, %v1923
        %v1925 = vpop.f32.mrf.mxu0
        %v1926 = vadd.f32 0.0, %v1925
        %v1927 = vpop.f32.mrf.mxu0
        %v1928 = vadd.f32 0.0, %v1927
        %v1929 = vpop.f32.mrf.mxu0
        %v1930 = vadd.f32 0.0, %v1929
        %1931 = vdwg.mxu0
        %v1932 = vadd.f32 %v1856, %v1924
        %v1933 = vadd.f32 %v1857, %v1926
        %v1934 = vadd.f32 %v1858, %v1928
        %v1935 = vadd.f32 %v1859, %v1930
        %1936 = vrot.lane.b32.xlu0 %v1321, 111
        %v1937 = vpop.permute.xlu0 %1936
        %1938 = vrot.lane.b32.xlu0 %v1322, 111
        %v1939 = vpop.permute.xlu0 %1938
        %1940 = vrot.lane.b32.xlu0 %v1323, 111
        %v1941 = vpop.permute.xlu0 %1940
        %1942 = vrot.lane.b32.xlu0 %v1324, 111
        %v1943 = vpop.permute.xlu0 %1942
        %v1944 = vsel %vm1216, %v1937, %v1939
        %v1945 = vsel %vm1216, %v1941, %v1943
        %v1950 = vsel %vm1216, %v1939, 0.0
        %v1951 = vsel %vm1216, %v1943, 0.0
        %v1952 = vpack.c.bf16 %v1945, %v1944
        %v1953 = vpack.c.bf16 %v1951, %v1950
        %s1954 = scalar_lea.vmem [#allocation5], 64
        %v1955 = vld [vmem:[%s1954] sm:$0xf]
        %v1956 = vld [vmem:[%s1954 + $0x4] sm:$0xf]
        %v1959 = vunpack.c.l.b16 %v1955
        %v1960 = vunpack.c.l.b16 %v1956
        %v1961 = vpack.c.b16 %v1960, %v1959
        %v1963 = vsel %vm598, %v1961, 0
        %1965 = vmatprep.subr.bf16.mxu0 0
        %1966 = vmatpush1.bf16.msra.mxu0 0
        %1967 = vmatprep.subr.bf16.mxu0 0
        %1968 = vmatpush1.bf16.msra.mxu0 0
        %1969 = vmatprep.subr.bf16.mxu0 0
        %1970 = vmatpush1.bf16.msra.mxu0 0
        %1971 = vmatprep.subr.bf16.mxu0 0
        %1972 = vmatpush1.bf16.msra.mxu0 0
        %1973 = vmatprep.subr.bf16.mxu0 0
        %1974 = vmatpush1.bf16.msra.mxu0 0
        %1975 = vmatprep.subr.bf16.mxu0 0
        %1976 = vmatpush1.bf16.msra.mxu0 0
        %1977 = vmatprep.subr.bf16.mxu0 0
        %1978 = vmatpush1.bf16.msra.mxu0 0
        %1979 = vmatprep.subr.bf16.mxu0 %v1953
        %1980 = vmatpush1.bf16.msra.mxu0 %v1952
        %1981 = vmatprep.subr.bf16.mxu0 0
        %1982 = vmatpush2.bf16.msra.mxu0 0
        %1983 = vmatprep.subr.bf16.mxu0 0
        %1984 = vmatpush2.bf16.msra.mxu0 0
        %1985 = vmatprep.subr.bf16.mxu0 0
        %1986 = vmatpush2.bf16.msra.mxu0 0
        %1987 = vmatprep.subr.bf16.mxu0 0
        %1988 = vmatpush2.bf16.msra.mxu0 0
        %1989 = vmatprep.subr.bf16.mxu0 0
        %1990 = vmatpush2.bf16.msra.mxu0 0
        %1991 = vmatprep.subr.bf16.mxu0 0
        %1992 = vmatpush2.bf16.msra.mxu0 0
        %1993 = vmatprep.subr.bf16.mxu0 0
        %1994 = vmatpush2.bf16.msra.mxu0 0
        %1995 = vmatprep.subr.bf16.mxu0 0
        %1996 = vmatpush2.bf16.msra.mxu0 0
        %1997 = vmatprep.mubr.bf16.mxu0 0
        %1998 = vmatmul.mubr.bf16.gmra.mxu0 %v1963
        %v1999 = vpop.f32.mrf.mxu0
        %v2000 = vadd.f32 0.0, %v1999
        %v2001 = vpop.f32.mrf.mxu0
        %v2002 = vadd.f32 0.0, %v2001
        %v2003 = vpop.f32.mrf.mxu0
        %v2004 = vadd.f32 0.0, %v2003
        %v2005 = vpop.f32.mrf.mxu0
        %v2006 = vadd.f32 0.0, %v2005
        %2007 = vdwg.mxu0
        %v2008 = vmul.f32 %v2000, %v813
        %v2009 = vmul.f32 %v2002, %v817
        %v2010 = vmul.f32 %v2004, %v813
        %v2011 = vmul.f32 %v2006, %v817
        %v2012 = vadd.f32 %v1932, %v2008
        %v2013 = vadd.f32 %v1933, %v2009
        %v2014 = vadd.f32 %v1934, %v2010
        %v2015 = vadd.f32 %v1935, %v2011
        %v2016 = vld [vmem:[%s8] sm:$0xff]
        %v2017 = vld [vmem:[%s8 + $0x8] sm:$0xff]
        %2019 = vset.pattern.permute.xlu0 0
        %2020 = vperm.xlu0 %2019, %v2016
        %v2021 = vpop.permute.xlu0 %2020
        %2024 = vset.pattern.permute.xlu0 0
        %2025 = vperm.xlu0 %2024, %v2017
        %v2026 = vpop.permute.xlu0 %2025
        %v2028 = vadd.f32 %v2012, %v2021
        %v2029 = vadd.f32 %v2013, %v2021
        %v2030 = vadd.f32 %v2014, %v2026
        %v2031 = vadd.f32 %v2015, %v2026
        %v2032 = vmul.f32 %v2028, 0.5
        %v2033 = vmul.f32 %v2029, 0.5
        %v2034 = vmul.f32 %v2030, 0.5
        %v2035 = vmul.f32 %v2031, 0.5
        %v2036 = vtanh.pop %v2032
        %v2037 = vtanh.pop %v2033
        %v2038 = vtanh.pop %v2034
        %v2039 = vtanh.pop %v2035
        %v2040 = vmul.f32 %v2036, 0.5
        %v2041 = vmul.f32 %v2037, 0.5
        %v2042 = vmul.f32 %v2038, 0.5
        %v2043 = vmul.f32 %v2039, 0.5
        %v2044 = vadd.f32 %v2040, 0.5
        %v2045 = vadd.f32 %v2041, 0.5
        %v2046 = vadd.f32 %v2042, 0.5
        %v2047 = vadd.f32 %v2043, 0.5
        %v2048 = vmul.f32 %v2028, %v2044
        %v2049 = vmul.f32 %v2029, %v2045
        %v2050 = vmul.f32 %v2030, %v2046
        %v2051 = vmul.f32 %v2031, %v2047
        %v2052 = vadd.f32 %v2048, %v564
        %v2053 = vadd.f32 %v2049, %v565
        %v2054 = vadd.f32 %v2050, %v566
        %v2055 = vadd.f32 %v2051, %v567
        %v2056 = vld [vmem:[%s9] sm:$0xf]
        %v2057 = vld [vmem:[%s9 + $0x4] sm:$0xf]
        %v2058 = vld [vmem:[%s9 + $0x8] sm:$0xf]
        %v2059 = vld [vmem:[%s9 + $0xc] sm:$0xf]
        %v2060 = vpack.c.bf16 %v562, %v560
        %v2061 = vpack.c.bf16 %v563, %v561
        %s2062 = scalar_lea.vmem %s9, 16
        %v2063 = vld [vmem:[%s2062] sm:$0xf]
        %v2064 = vld [vmem:[%s2062 + $0x4] sm:$0xf]
        %v2065 = vld [vmem:[%s2062 + $0x8] sm:$0xf]
        %v2066 = vld [vmem:[%s2062 + $0xc] sm:$0xf]
        %v2071 = vunpack.c.l.b16 %v2063
        %v2072 = vunpack.c.l.b16 %v2064
        %v2073 = vunpack.c.l.b16 %v2065
        %v2074 = vunpack.c.l.b16 %v2066
        %v2075 = vpack.c.b16 %v2072, %v2071
        %v2076 = vpack.c.b16 %v2074, %v2073
        %v2078 = vsel %vm598, %v2075, 0
        %v2081 = vsel %vm598, %v2076, 0
        %2083 = vmatprep.subr.bf16.mxu0 0
        %2084 = vmatpush1.bf16.msra.mxu0 0
        %2085 = vmatprep.subr.bf16.mxu0 0
        %2086 = vmatpush1.bf16.msra.mxu0 0
        %2087 = vmatprep.subr.bf16.mxu0 0
        %2088 = vmatpush1.bf16.msra.mxu0 0
        %2089 = vmatprep.subr.bf16.mxu0 0
        %2090 = vmatpush1.bf16.msra.mxu0 0
        %2091 = vmatprep.subr.bf16.mxu0 0
        %2092 = vmatpush1.bf16.msra.mxu0 0
        %2093 = vmatprep.subr.bf16.mxu0 0
        %2094 = vmatpush1.bf16.msra.mxu0 0
        %2095 = vmatprep.subr.bf16.mxu0 0
        %2096 = vmatpush1.bf16.msra.mxu0 0
        %2097 = vmatprep.subr.bf16.mxu0 %v910
        %2098 = vmatpush1.bf16.msra.mxu0 %v909
        %2099 = vmatprep.subr.bf16.mxu0 0
        %2100 = vmatpush2.bf16.msra.mxu0 0
        %2101 = vmatprep.subr.bf16.mxu0 0
        %2102 = vmatpush2.bf16.msra.mxu0 0
        %2103 = vmatprep.subr.bf16.mxu0 0
        %2104 = vmatpush2.bf16.msra.mxu0 0
        %2105 = vmatprep.subr.bf16.mxu0 0
        %2106 = vmatpush2.bf16.msra.mxu0 0
        %2107 = vmatprep.subr.bf16.mxu0 0
        %2108 = vmatpush2.bf16.msra.mxu0 0
        %2109 = vmatprep.subr.bf16.mxu0 0
        %2110 = vmatpush2.bf16.msra.mxu0 0
        %2111 = vmatprep.subr.bf16.mxu0 0
        %2112 = vmatpush2.bf16.msra.mxu0 0
        %2113 = vmatprep.subr.bf16.mxu0 0
        %2114 = vmatpush2.bf16.msra.mxu0 0
        %2115 = vmatprep.mubr.bf16.mxu0 0
        %2116 = vmatmul.mubr.bf16.gmra.mxu0 %v2078
        %v2117 = vpop.f32.mrf.mxu0
        %v2118 = vadd.f32 0.0, %v2117
        %v2119 = vpop.f32.mrf.mxu0
        %v2120 = vadd.f32 0.0, %v2119
        %v2121 = vpop.f32.mrf.mxu0
        %v2122 = vadd.f32 0.0, %v2121
        %v2123 = vpop.f32.mrf.mxu0
        %v2124 = vadd.f32 0.0, %v2123
        %2125 = vmatprep.mubr.bf16.mxu0 0
        %2126 = vmatmul.mubr.bf16.gmra.mxu0 %v2081
        %v2127 = vpop.f32.mrf.mxu0
        %v2128 = vadd.f32 0.0, %v2127
        %v2129 = vpop.f32.mrf.mxu0
        %v2130 = vadd.f32 0.0, %v2129
        %v2131 = vpop.f32.mrf.mxu0
        %v2132 = vadd.f32 0.0, %v2131
        %v2133 = vpop.f32.mrf.mxu0
        %v2134 = vadd.f32 0.0, %v2133
        %2135 = vdwg.mxu0
        %v2140 = vunpack.c.l.b16 %v2056
        %v2141 = vunpack.c.l.b16 %v2057
        %v2142 = vunpack.c.l.b16 %v2058
        %v2143 = vunpack.c.l.b16 %v2059
        %v2144 = vpack.c.b16 %v2141, %v2140
        %v2145 = vpack.c.b16 %v2143, %v2142
        %v2147 = vsel %vm598, %v2144, 0
        %v2150 = vsel %vm598, %v2145, 0
        %2152 = vmatprep.subr.bf16.mxu0 0
        %2153 = vmatpush1.bf16.msra.mxu0 0
        %2154 = vmatprep.subr.bf16.mxu0 0
        %2155 = vmatpush1.bf16.msra.mxu0 0
        %2156 = vmatprep.subr.bf16.mxu0 0
        %2157 = vmatpush1.bf16.msra.mxu0 0
        %2158 = vmatprep.subr.bf16.mxu0 0
        %2159 = vmatpush1.bf16.msra.mxu0 0
        %2160 = vmatprep.subr.bf16.mxu0 0
        %2161 = vmatpush1.bf16.msra.mxu0 0
        %2162 = vmatprep.subr.bf16.mxu0 0
        %2163 = vmatpush1.bf16.msra.mxu0 0
        %2164 = vmatprep.subr.bf16.mxu0 0
        %2165 = vmatpush1.bf16.msra.mxu0 0
        %2166 = vmatprep.subr.bf16.mxu0 %v2061
        %2167 = vmatpush1.bf16.msra.mxu0 %v2060
        %2168 = vmatprep.subr.bf16.mxu0 0
        %2169 = vmatpush2.bf16.msra.mxu0 0
        %2170 = vmatprep.subr.bf16.mxu0 0
        %2171 = vmatpush2.bf16.msra.mxu0 0
        %2172 = vmatprep.subr.bf16.mxu0 0
        %2173 = vmatpush2.bf16.msra.mxu0 0
        %2174 = vmatprep.subr.bf16.mxu0 0
        %2175 = vmatpush2.bf16.msra.mxu0 0
        %2176 = vmatprep.subr.bf16.mxu0 0
        %2177 = vmatpush2.bf16.msra.mxu0 0
        %2178 = vmatprep.subr.bf16.mxu0 0
        %2179 = vmatpush2.bf16.msra.mxu0 0
        %2180 = vmatprep.subr.bf16.mxu0 0
        %2181 = vmatpush2.bf16.msra.mxu0 0
        %2182 = vmatprep.subr.bf16.mxu0 0
        %2183 = vmatpush2.bf16.msra.mxu0 0
        %2184 = vmatprep.mubr.bf16.mxu0 0
        %2185 = vmatmul.mubr.bf16.gmra.mxu0 %v2147
        %v2186 = vpop.f32.mrf.mxu0
        %v2187 = vadd.f32 %v2118, %v2186
        %v2188 = vpop.f32.mrf.mxu0
        %v2189 = vadd.f32 %v2120, %v2188
        %v2190 = vpop.f32.mrf.mxu0
        %v2191 = vadd.f32 %v2122, %v2190
        %v2192 = vpop.f32.mrf.mxu0
        %v2193 = vadd.f32 %v2124, %v2192
        %2194 = vmatprep.mubr.bf16.mxu0 0
        %2195 = vmatmul.mubr.bf16.gmra.mxu0 %v2150
        %v2196 = vpop.f32.mrf.mxu0
        %v2197 = vadd.f32 %v2128, %v2196
        %v2198 = vpop.f32.mrf.mxu0
        %v2199 = vadd.f32 %v2130, %v2198
        %v2200 = vpop.f32.mrf.mxu0
        %v2201 = vadd.f32 %v2132, %v2200
        %v2202 = vpop.f32.mrf.mxu0
        %v2203 = vadd.f32 %v2134, %v2202
        %2204 = vdwg.mxu0
        %s2205 = scalar_lea.vmem %s9, 32
        %v2206 = vld [vmem:[%s2205] sm:$0xf]
        %v2207 = vld [vmem:[%s2205 + $0x4] sm:$0xf]
        %v2208 = vld [vmem:[%s2205 + $0x8] sm:$0xf]
        %v2209 = vld [vmem:[%s2205 + $0xc] sm:$0xf]
        %v2210 = vpack.c.bf16 %v2054, %v2052
        %v2211 = vpack.c.bf16 %v2055, %v2053
        %v2216 = vunpack.c.l.b16 %v2206
        %v2217 = vunpack.c.l.b16 %v2207
        %v2218 = vunpack.c.l.b16 %v2208
        %v2219 = vunpack.c.l.b16 %v2209
        %v2220 = vpack.c.b16 %v2217, %v2216
        %v2221 = vpack.c.b16 %v2219, %v2218
        %v2223 = vsel %vm598, %v2220, 0
        %v2226 = vsel %vm598, %v2221, 0
        %2228 = vmatprep.subr.bf16.mxu0 0
        %2229 = vmatpush1.bf16.msra.mxu0 0
        %2230 = vmatprep.subr.bf16.mxu0 0
        %2231 = vmatpush1.bf16.msra.mxu0 0
        %2232 = vmatprep.subr.bf16.mxu0 0
        %2233 = vmatpush1.bf16.msra.mxu0 0
        %2234 = vmatprep.subr.bf16.mxu0 0
        %2235 = vmatpush1.bf16.msra.mxu0 0
        %2236 = vmatprep.subr.bf16.mxu0 0
        %2237 = vmatpush1.bf16.msra.mxu0 0
        %2238 = vmatprep.subr.bf16.mxu0 0
        %2239 = vmatpush1.bf16.msra.mxu0 0
        %2240 = vmatprep.subr.bf16.mxu0 0
        %2241 = vmatpush1.bf16.msra.mxu0 0
        %2242 = vmatprep.subr.bf16.mxu0 %v2211
        %2243 = vmatpush1.bf16.msra.mxu0 %v2210
        %2244 = vmatprep.subr.bf16.mxu0 0
        %2245 = vmatpush2.bf16.msra.mxu0 0
        %2246 = vmatprep.subr.bf16.mxu0 0
        %2247 = vmatpush2.bf16.msra.mxu0 0
        %2248 = vmatprep.subr.bf16.mxu0 0
        %2249 = vmatpush2.bf16.msra.mxu0 0
        %2250 = vmatprep.subr.bf16.mxu0 0
        %2251 = vmatpush2.bf16.msra.mxu0 0
        %2252 = vmatprep.subr.bf16.mxu0 0
        %2253 = vmatpush2.bf16.msra.mxu0 0
        %2254 = vmatprep.subr.bf16.mxu0 0
        %2255 = vmatpush2.bf16.msra.mxu0 0
        %2256 = vmatprep.subr.bf16.mxu0 0
        %2257 = vmatpush2.bf16.msra.mxu0 0
        %2258 = vmatprep.subr.bf16.mxu0 0
        %2259 = vmatpush2.bf16.msra.mxu0 0
        %2260 = vmatprep.mubr.bf16.mxu0 0
        %2261 = vmatmul.mubr.bf16.gmra.mxu0 %v2223
        %v2262 = vpop.f32.mrf.mxu0
        %v2263 = vadd.f32 0.0, %v2262
        %v2264 = vpop.f32.mrf.mxu0
        %v2265 = vadd.f32 0.0, %v2264
        %v2266 = vpop.f32.mrf.mxu0
        %v2267 = vadd.f32 0.0, %v2266
        %v2268 = vpop.f32.mrf.mxu0
        %v2269 = vadd.f32 0.0, %v2268
        %2270 = vmatprep.mubr.bf16.mxu0 0
        %2271 = vmatmul.mubr.bf16.gmra.mxu0 %v2226
        %v2272 = vpop.f32.mrf.mxu0
        %v2273 = vadd.f32 0.0, %v2272
        %v2274 = vpop.f32.mrf.mxu0
        %v2275 = vadd.f32 0.0, %v2274
        %v2276 = vpop.f32.mrf.mxu0
        %v2277 = vadd.f32 0.0, %v2276
        %v2278 = vpop.f32.mrf.mxu0
        %v2279 = vadd.f32 0.0, %v2278
        %2280 = vdwg.mxu0
        %v2281 = vadd.f32 %v2187, %v2263
        %v2282 = vadd.f32 %v2189, %v2265
        %v2283 = vadd.f32 %v2191, %v2267
        %v2284 = vadd.f32 %v2193, %v2269
        %v2285 = vadd.f32 %v2197, %v2273
        %v2286 = vadd.f32 %v2199, %v2275
        %v2287 = vadd.f32 %v2201, %v2277
        %v2288 = vadd.f32 %v2203, %v2279
        %v2289 = vld [vmem:[%s10] sm:$0xff]
        %v2290 = vld [vmem:[%s10 + $0x8] sm:$0xff]
        %v2291 = vld [vmem:[%s10 + $0x10] sm:$0xff]
        %v2292 = vld [vmem:[%s10 + $0x18] sm:$0xff]
        %2294 = vset.pattern.permute.xlu0 0
        %2295 = vperm.xlu0 %2294, %v2289
        %v2296 = vpop.permute.xlu0 %2295
        %2299 = vset.pattern.permute.xlu0 0
        %2300 = vperm.xlu0 %2299, %v2290
        %v2301 = vpop.permute.xlu0 %2300
        %2304 = vset.pattern.permute.xlu0 0
        %2305 = vperm.xlu0 %2304, %v2291
        %v2306 = vpop.permute.xlu0 %2305
        %2309 = vset.pattern.permute.xlu0 0
        %2310 = vperm.xlu0 %2309, %v2292
        %v2311 = vpop.permute.xlu0 %2310
        %v2313 = vadd.f32 %v2281, %v2296
        %v2314 = vadd.f32 %v2282, %v2296
        %v2315 = vadd.f32 %v2283, %v2301
        %v2316 = vadd.f32 %v2284, %v2301
        %v2317 = vadd.f32 %v2285, %v2306
        %v2318 = vadd.f32 %v2286, %v2306
        %v2319 = vadd.f32 %v2287, %v2311
        %v2320 = vadd.f32 %v2288, %v2311
        %v2321 = vmul.f32 %v2313, 0.5
        %v2322 = vmul.f32 %v2314, 0.5
        %v2323 = vmul.f32 %v2315, 0.5
        %v2324 = vmul.f32 %v2316, 0.5
        %v2325 = vmul.f32 %v2317, 0.5
        %v2326 = vmul.f32 %v2318, 0.5
        %v2327 = vmul.f32 %v2319, 0.5
        %v2328 = vmul.f32 %v2320, 0.5
        %v2329 = vtanh.pop %v2321
        %v2330 = vtanh.pop %v2322
        %v2331 = vtanh.pop %v2323
        %v2332 = vtanh.pop %v2324
        %v2333 = vtanh.pop %v2325
        %v2334 = vtanh.pop %v2326
        %v2335 = vtanh.pop %v2327
        %v2336 = vtanh.pop %v2328
        %v2337 = vmul.f32 %v2329, 0.5
        %v2338 = vmul.f32 %v2330, 0.5
        %v2339 = vmul.f32 %v2331, 0.5
        %v2340 = vmul.f32 %v2332, 0.5
        %v2341 = vmul.f32 %v2333, 0.5
        %v2342 = vmul.f32 %v2334, 0.5
        %v2343 = vmul.f32 %v2335, 0.5
        %v2344 = vmul.f32 %v2336, 0.5
        %v2345 = vadd.f32 %v2337, 0.5
        %v2346 = vadd.f32 %v2338, 0.5
        %v2347 = vadd.f32 %v2339, 0.5
        %v2348 = vadd.f32 %v2340, 0.5
        %v2349 = vadd.f32 %v2341, 0.5
        %v2350 = vadd.f32 %v2342, 0.5
        %v2351 = vadd.f32 %v2343, 0.5
        %v2352 = vadd.f32 %v2344, 0.5
        %v2353 = vmul.f32 %v2313, %v2345
        %v2354 = vmul.f32 %v2314, %v2346
        %v2355 = vmul.f32 %v2315, %v2347
        %v2356 = vmul.f32 %v2316, %v2348
        %v2357 = vmul.f32 %v2317, %v2349
        %v2358 = vmul.f32 %v2318, %v2350
        %v2359 = vmul.f32 %v2319, %v2351
        %v2360 = vmul.f32 %v2320, %v2352
        %2361 = vst [vmem:[%s409] sm:$0xff] %v2353
        %2362 = vst [vmem:[%s409 + $0x8] sm:$0xff] %v2354
        %2363 = vst [vmem:[%s409 + $0x10] sm:$0xff] %v2355
        %2364 = vst [vmem:[%s409 + $0x18] sm:$0xff] %v2356
        %2365 = vst [vmem:[%s409 + $0x20] sm:$0xff] %v2357
        %2366 = vst [vmem:[%s409 + $0x28] sm:$0xff] %v2358
        %2367 = vst [vmem:[%s409 + $0x30] sm:$0xff] %v2359
        %2368 = vst [vmem:[%s409 + $0x38] sm:$0xff] %v2360
        %s2369 = sand.u32 %s271, 1
        %s2370 = scalar_lea.sflag [#allocation4], %s2369
        %s2371 = sand.u32 %s271, 1
        %s2372 = smul.addr %s2371, 64
        %s2373 = scalar_lea.vmem [#allocation7], %s2372
        // Predicated region
        $region73: #{tpu_custom_call.1} parent=63 // pred_check
          %p2374 = pneg %p281
        $region74: #{tpu_custom_call.1} parent=63 // pred_check_branch
          %2376 = sbr.rel (%p2374) target = $region76
        $region75: #{tpu_custom_call.1} parent=63 // pred_region
          %s2378 = ssub.s32 1024, 1024
          %2379 = vsyncadd %s2370, %s2378
          %s2380 = smul.addr %s27, 8
          %s2381 = smul.addr %s2380, 128
          %s2382 = scalar_lea.hbm %s11, %s2381
          %s2383 = sshll.u32 %s2373, 4
          %s2384 = int_to_ptr.vmem [resolvable:$true] %s2383
          %2389 = dma.vmem_to_hbm [thread:$0]  %s2384, 1024, %s2382, %s2370, 256, 256, 16
        $region76: #{tpu_custom_call.1} parent=63 // pred_fallthru
          _
      $region64: #{tpu_custom_call.1} parent=5 // pred_fallthru
        _
      %p2390 = scmp.le.s32.totalorder 2, %s22
      // Predicated region
      $region77: #{tpu_custom_call.1} parent=5 // pred_check
        %p2391 = pneg %p2390
      $region78: #{tpu_custom_call.1} parent=5 // pred_check_branch
        %2393 = sbr.rel (%p2391) target = $region80
      $region79: #{tpu_custom_call.1} parent=5 // pred_region
        %s2394 = ssub.s32 %s22, 2
        // Predicated region
        $region81: #{tpu_custom_call.1} parent=79 // pred_check
          %p2395 = pneg %p287
        $region82: #{tpu_custom_call.1} parent=79 // pred_check_branch
          %2397 = sbr.rel (%p2395) target = $region84
        $region83: #{tpu_custom_call.1} parent=79 // pred_region
          %s2398 = sand.u32 %s272, 1
          %s2399 = scalar_lea.sflag [#allocation4], %s2398
          %s2400 = sand.u32 %s272, 1
          %s2401 = smul.addr %s2400, 64
          %s2402 = scalar_lea.vmem [#allocation7], %s2401
          %2403 = dma.done %s2399, 1024
        $region84: #{tpu_custom_call.1} parent=79 // pred_fallthru
          _
      $region80: #{tpu_custom_call.1} parent=5 // pred_fallthru
        _
    $region6: #{tpu_custom_call.1} parent=1 // loop_footer
      %s26 = sadd.s32 1, %s22
    $region7: #{tpu_custom_call.1} parent=1 // loop_footer_branch
      %21 = sbr.rel target = $region3
    $region8: #{tpu_custom_call.1} parent=1 // loop_exit
      _
    %2404 = vsyncpa [#allocation3], 1
    %s2405 = scalar_lea.sflag [#allocation3], 1
    %2406 = vsyncpa %s2405, 1
    %2407 = vsyncpa [#allocation6], 1
    %2408 = vsyncpa [#allocation4], 1
    %s2409 = scalar_lea.sflag [#allocation4], 1
    %2410 = vsyncpa %s2409, 1

</llo_original>
